<compile_context>
chip_gen: v7x
topology: tpu7x:2x2x1
jax: 0.10.0
libtpu: 0.0.40
codegen_flags: <defaults>
</compile_context>

<pallas_src>
import jax
import jax.numpy as jnp
import numpy as np
from jax.experimental import pallas as pl
from jax.experimental.pallas import tpu as pltpu

OBS_DIM = 24                 # obs_dim
SCAN_DIM = 16                # scan_dim (last SCAN_DIM entries are the lidar scan)
ND = OBS_DIM - SCAN_DIM      # non-scan part
ACT_DIM = 2                  # (lin_vel, ang_vel)
HIDDEN = 256                 # fixed by the module definition

LANE = 128
TILE_B = 128                 # batch tile on the lane axis
BATCH = 256                  # example batch -> grid of 2 "parallel" steps


def attn_actor_kernel(obs_ref,                  # (OBS_DIM, TB) f32  VMEM (transposed obs)
                      attn_ref,                 # (8,)        f32  SMEM [wq,wk,wv,bq,bk,bv,ow,ob]
                      w1t_ref, b1_ref,          # (256,24) bf16, (256,1) f32
                      w2t_ref, b2_ref,          # (256,256) bf16, (256,1) f32
                      wht_ref, bh_ref,          # (2,256)  bf16, (2,1)   f32
                      out_ref,                  # (ACT_DIM, TB) f32
                      x_scr):                   # (OBS_DIM, TB) f32 VMEM scratch
    obs = obs_ref[...]                          # (24, TB) f32
    s1 = obs[ND:, :]                            # (16, TB)  scan part (the query)

    wq = attn_ref[0]; wk = attn_ref[1]; wv = attn_ref[2]
    bq = attn_ref[3]; bk = attn_ref[4]; bv = attn_ref[5]
    ow = attn_ref[6]; ob = attn_ref[7]

    # q/k/v projections (embed_dim = 1 -> scalar affine), scale = head_dim**-0.5 = 1
    q = wq * s1 + bq                            # (16, TB)
    k = wk * obs + bk                           # (24, TB)
    v = wv * obs + bv                           # (24, TB)

    # rank-1 max shortcut: max_d(q_s*k_d) = q_s*kmax if q_s>=0 else q_s*kmin
    kmax = jnp.max(k, axis=0, keepdims=True)    # (1, TB)
    kmin = jnp.min(k, axis=0, keepdims=True)    # (1, TB)
    m = q * jnp.where(q >= 0.0, kmax, kmin)     # (16, TB), exact softmax max

    # deferred softmax normalization; batch stays on the 128-lane axis.
    e = jnp.exp(q[:, None, :] * k[None, :, :] - m[:, None, :])   # (16, 24, TB)
    num = jnp.sum(e * v[None, :, :], axis=1)    # (16, TB)  unnormalized weights @ V
    den = jnp.sum(e, axis=1)                    # (16, TB)
    attn = num * pl.reciprocal(den, approx=True)
    attn = ow * attn + ob                       # out_proj (1x1 linear)

    # obs_attn = concat([s0, s1*attn]) along the feature (sublane) axis:
    # assemble it in a tiny f32 scratch (8-row / 16-row tile-aligned stores),
    # so the first layer is ONE K=24 MXU contraction.
    x_scr[:ND, :] = obs[:ND, :]
    x_scr[ND:, :] = s1 * attn
    x = x_scr[...].astype(jnp.bfloat16)         # (24, TB) bf16

    h1 = jnp.maximum(
        jnp.dot(w1t_ref[...], x, preferred_element_type=jnp.float32)
        + b1_ref[...], 0.0)                     # (256, TB) f32
    h2 = jnp.maximum(
        jnp.dot(w2t_ref[...], h1.astype(jnp.bfloat16),
                preferred_element_type=jnp.float32)
        + b2_ref[...], 0.0)                     # (256, TB) f32

    # fused heads; 0.5 folded into the lin row so one tanh serves both heads:
    # sigmoid(x) = 0.5*tanh(x/2) + 0.5
    head = jnp.dot(wht_ref[...], h2.astype(jnp.bfloat16),
                   preferred_element_type=jnp.float32) + bh_ref[...]   # (2, TB)
    t = jnp.tanh(head)
    row = jax.lax.broadcasted_iota(jnp.int32, t.shape, 0)
    out_ref[...] = jnp.where(row == 0, 0.5 * t + 0.5, t)


def attn_actor_forward(obs, kp, *, tile_b=TILE_B):
    """obs: (B, OBS_DIM) f32; kp: prepared kernel params (see prepare_params)."""
    B = obs.shape[0]
    Bp = ((B + tile_b - 1) // tile_b) * tile_b
    obs_t = obs.T                                  # (OBS_DIM, B): batch -> lanes
    if Bp != B:
        obs_t = jnp.pad(obs_t, ((0, 0), (0, Bp - B)))

    const = lambda i: (0, 0)
    flops = (2 * Bp * (OBS_DIM * HIDDEN + HIDDEN * HIDDEN + HIDDEN * ACT_DIM)
             + 4 * Bp * SCAN_DIM * OBS_DIM)
    transcendentals = Bp * (SCAN_DIM * OBS_DIM + SCAN_DIM + ACT_DIM)
    bytes_accessed = (Bp * OBS_DIM * 4 + Bp * ACT_DIM * 4
                      + (HIDDEN * OBS_DIM + HIDDEN * HIDDEN + ACT_DIM * HIDDEN) * 2
                      + (2 * HIDDEN + ACT_DIM) * 4 + 8 * 4)

    out_t = pl.pallas_call(
        attn_actor_kernel,
        out_shape=jax.ShapeDtypeStruct((ACT_DIM, Bp), jnp.float32),
        grid=(Bp // tile_b,),
        in_specs=[
            pl.BlockSpec((OBS_DIM, tile_b), lambda i: (0, i)),        # obs^T tile
            pl.BlockSpec(memory_space=pltpu.MemorySpace.SMEM),        # attn scalars
            pl.BlockSpec((HIDDEN, OBS_DIM), const),                   # W1^T
            pl.BlockSpec((HIDDEN, 1), const),                         # b1^T
            pl.BlockSpec((HIDDEN, HIDDEN), const),                    # W2^T
            pl.BlockSpec((HIDDEN, 1), const),                         # b2^T
            pl.BlockSpec((ACT_DIM, HIDDEN), const),                   # Wh^T
            pl.BlockSpec((ACT_DIM, 1), const),                        # bh^T
        ],
        out_specs=pl.BlockSpec((ACT_DIM, tile_b), lambda i: (0, i)),  # lane-dense out
        scratch_shapes=[pltpu.VMEM((OBS_DIM, tile_b), jnp.float32)],
        compiler_params=pltpu.CompilerParams(
            dimension_semantics=("parallel",)),
        cost_estimate=pl.CostEstimate(flops=flops,
                                      transcendentals=transcendentals,
                                      bytes_accessed=bytes_accessed),
    )(obs_t, kp["attn_scalars"],
      kp["w1t"], kp["b1t"], kp["w2t"], kp["b2t"], kp["wht"], kp["bht"])
    return out_t[:, :B].T


def init_params(key):
    """Module-semantics (f32) parameters, mirroring the PyTorch layers."""
    ks = jax.random.split(key, 12)

    def u(k, shape, scale):
        return jax.random.uniform(k, shape, jnp.float32, -scale, scale)

    s_in = 1.0 / np.sqrt(OBS_DIM)
    s_h = 1.0 / np.sqrt(HIDDEN)
    return dict(
        # nn.MultiheadAttention(embed_dim=1, num_heads=1):
        #   in_proj_weight (3,1) -> 3 scalars [wq, wk, wv]; in_proj_bias (3,)
        #   out_proj: Linear(1, 1)
        in_proj_w=u(ks[0], (3,), 1.0),
        in_proj_b=u(ks[1], (3,), 0.5),
        out_proj_w=u(ks[2], (1,), 1.0),
        out_proj_b=u(ks[3], (1,), 0.5),
        # pi
        w1=u(ks[4], (OBS_DIM, HIDDEN), s_in),
        b1=u(ks[5], (1, HIDDEN), s_in),
        w2=u(ks[6], (HIDDEN, HIDDEN), s_h),
        b2=u(ks[7], (1, HIDDEN), s_h),
        # pi_lin / pi_ang
        wl=u(ks[8], (HIDDEN, 1), s_h),
        bl=u(ks[9], (1, 1), s_h),
        wa=u(ks[10], (HIDDEN, 1), s_h),
        ba=u(ks[11], (1, 1), s_h),
    )


def prepare_params(p):
    """One-time packing: transposed weights, fused heads, bf16 MXU operands."""
    wh = jnp.concatenate([0.5 * p["wl"], p["wa"]], axis=-1)   # (256, 2); 0.5 fold (sigmoid-as-tanh)
    bh = jnp.concatenate([0.5 * p["bl"], p["ba"]], axis=-1)   # (1, 2)
    attn_scalars = jnp.concatenate(
        [p["in_proj_w"], p["in_proj_b"], p["out_proj_w"], p["out_proj_b"]]
    ).astype(jnp.float32)                                     # (8,)
    return dict(
        attn_scalars=attn_scalars,
        w1t=p["w1"].T.astype(jnp.bfloat16),                   # (256, 24)
        b1t=p["b1"].T,                                        # (256, 1)
        w2t=p["w2"].T.astype(jnp.bfloat16),                   # (256, 256)
        b2t=p["b2"].T,                                        # (256, 1)
        wht=wh.T.astype(jnp.bfloat16),                        # (2, 256)
        bht=bh.T,                                             # (2, 1)
    )


def reference_f32(obs, p):
    """Pure-JAX f32 reference mirroring the PyTorch forward exactly."""
    s0, s1 = obs[:, :ND], obs[:, ND:]
    q = p["in_proj_w"][0] * s1 + p["in_proj_b"][0]
    k = p["in_proj_w"][1] * obs + p["in_proj_b"][1]
    v = p["in_proj_w"][2] * obs + p["in_proj_b"][2]
    w = jax.nn.softmax(q[:, :, None] * k[:, None, :], axis=-1)
    attn = jnp.sum(w * v[:, None, :], axis=-1)
    attn = p["out_proj_w"][0] * attn + p["out_proj_b"][0]
    obs_attn = jnp.concatenate([s0, s1 * attn], axis=-1)
    h1 = jax.nn.relu(obs_attn @ p["w1"] + p["b1"])
    h2 = jax.nn.relu(h1 @ p["w2"] + p["b2"])
    lin = jax.nn.sigmoid(h2 @ p["wl"] + p["bl"])
    ang = jnp.tanh(h2 @ p["wa"] + p["ba"])
    return jnp.concatenate([lin, ang], axis=-1)


def reference_bf16(obs, kp):
    """Reference matching the kernel's numerics (transposed, bf16 MXU, f32 acc);
    only difference: exact 1/den instead of the approx reciprocal."""
    a = kp["attn_scalars"]
    obs_t = obs.T
    s0, s1 = obs_t[:ND], obs_t[ND:]
    q = a[0] * s1 + a[3]
    k = a[1] * obs_t + a[4]
    v = a[2] * obs_t + a[5]
    sc = q[:, None, :] * k[None, :, :]
    m = jnp.max(sc, axis=1, keepdims=True)
    e = jnp.exp(sc - m)
    attn = jnp.sum(e * v[None, :, :], axis=1) / jnp.sum(e, axis=1)
    attn = a[6] * attn + a[7]
    x = jnp.concatenate([s0, s1 * attn], axis=0).astype(jnp.bfloat16)
    h1 = jax.nn.relu(
        jnp.dot(kp["w1t"], x, preferred_element_type=jnp.float32) + kp["b1t"])
    h2 = jax.nn.relu(
        jnp.dot(kp["w2t"], h1.astype(jnp.bfloat16),
                preferred_element_type=jnp.float32) + kp["b2t"])
    head = jnp.dot(kp["wht"], h2.astype(jnp.bfloat16),
                   preferred_element_type=jnp.float32) + kp["bht"]
    t = jnp.tanh(head)
    out_t = jnp.where(jnp.arange(ACT_DIM)[:, None] == 0, 0.5 * t + 0.5, t)
    return out_t.T


if __name__ == "__main__":
    key = jax.random.PRNGKey(0)
    pkey, okey = jax.random.split(key)
    params = init_params(pkey)
    kparams = prepare_params(params)
    obs = jax.random.normal(okey, (BATCH, OBS_DIM), jnp.float32)

    out = attn_actor_forward(obs, kparams, tile_b=TILE_B)
    jax.block_until_ready(out)
    assert out.shape == (BATCH, ACT_DIM)

    # Check against a reference with matching bf16 matmul numerics
    # (slightly loosened because the kernel uses the EUP approx reciprocal).
    ref_b = reference_bf16(obs, kparams)
    np.testing.assert_allclose(np.asarray(out), np.asarray(ref_b), rtol=1e-2, atol=1e-2)

    # Sanity check against the pure-f32 module semantics.
    ref_f = reference_f32(obs, params)
    np.testing.assert_allclose(np.asarray(out), np.asarray(ref_f), rtol=2e-2, atol=3e-2)

    print("KERNEL_OK")
</pallas_src>

<mosaic_0001>
module attributes {stable_mosaic.version = 11 : i64} {
  func.func @attn_actor_kernel(%arg0: i32, %arg1: memref<24x128xf32, #tpu.memory_space<vmem>>, %arg2: memref<8xf32, #tpu.memory_space<smem>>, %arg3: memref<256x24xbf16, #tpu.memory_space<vmem>>, %arg4: memref<256x1xf32, #tpu.memory_space<vmem>>, %arg5: memref<256x256xbf16, #tpu.memory_space<vmem>>, %arg6: memref<256x1xf32, #tpu.memory_space<vmem>>, %arg7: memref<2x256xbf16, #tpu.memory_space<vmem>>, %arg8: memref<2x1xf32, #tpu.memory_space<vmem>>, %arg9: memref<2x128xf32, #tpu.memory_space<vmem>>, %arg10: memref<24x128xf32, #tpu.memory_space<vmem>>) attributes {dimension_semantics = [#tpu.dimension_semantics<parallel>], iteration_bounds = array<i64: 2>, scalar_prefetch = 0 : i64, scratch_operands = 1 : i64, tpu.core_type = #tpu.core_type<tc>, window_params = [{transform_indices = @transform_0, window_bounds = array<i64: 24, 128>}, {transform_indices = @transform_1, window_bounds = array<i64: 8>}, {pipeline_mode = #tpu.pipeline_mode<synchronous>, transform_indices = @transform_2, window_bounds = array<i64: 256, 24>}, {pipeline_mode = #tpu.pipeline_mode<synchronous>, transform_indices = @transform_3, window_bounds = array<i64: 256, 1>}, {pipeline_mode = #tpu.pipeline_mode<synchronous>, transform_indices = @transform_4, window_bounds = array<i64: 256, 256>}, {pipeline_mode = #tpu.pipeline_mode<synchronous>, transform_indices = @transform_5, window_bounds = array<i64: 256, 1>}, {pipeline_mode = #tpu.pipeline_mode<synchronous>, transform_indices = @transform_6, window_bounds = array<i64: 2, 256>}, {pipeline_mode = #tpu.pipeline_mode<synchronous>, transform_indices = @transform_7, window_bounds = array<i64: 2, 1>}, {transform_indices = @transform_8, window_bounds = array<i64: 2, 128>}]} {
    %c0 = arith.constant 0 : index
    %c0_0 = arith.constant 0 : index
    %0 = vector.load %arg1[%c0, %c0_0] : memref<24x128xf32, #tpu.memory_space<vmem>>, vector<24x128xf32>
    %1 = vector.extract_strided_slice %0 {offsets = [8, 0], sizes = [16, 128], strides = [1, 1]} : vector<24x128xf32> to vector<16x128xf32>
    %c0_1 = arith.constant 0 : index
    %2 = memref.load %arg2[%c0_1] : memref<8xf32, #tpu.memory_space<smem>>
    %c1 = arith.constant 1 : index
    %3 = memref.load %arg2[%c1] : memref<8xf32, #tpu.memory_space<smem>>
    %c2 = arith.constant 2 : index
    %4 = memref.load %arg2[%c2] : memref<8xf32, #tpu.memory_space<smem>>
    %c3 = arith.constant 3 : index
    %5 = memref.load %arg2[%c3] : memref<8xf32, #tpu.memory_space<smem>>
    %c4 = arith.constant 4 : index
    %6 = memref.load %arg2[%c4] : memref<8xf32, #tpu.memory_space<smem>>
    %c5 = arith.constant 5 : index
    %7 = memref.load %arg2[%c5] : memref<8xf32, #tpu.memory_space<smem>>
    %c6 = arith.constant 6 : index
    %8 = memref.load %arg2[%c6] : memref<8xf32, #tpu.memory_space<smem>>
    %c7 = arith.constant 7 : index
    %9 = memref.load %arg2[%c7] : memref<8xf32, #tpu.memory_space<smem>>
    %10 = vector.broadcast %2 : f32 to vector<16x128xf32>
    %11 = arith.mulf %10, %1 : vector<16x128xf32>
    %12 = vector.broadcast %5 : f32 to vector<16x128xf32>
    %13 = arith.addf %11, %12 : vector<16x128xf32>
    %14 = vector.broadcast %3 : f32 to vector<24x128xf32>
    %15 = arith.mulf %14, %0 : vector<24x128xf32>
    %16 = vector.broadcast %6 : f32 to vector<24x128xf32>
    %17 = arith.addf %15, %16 : vector<24x128xf32>
    %18 = vector.broadcast %4 : f32 to vector<24x128xf32>
    %19 = arith.mulf %18, %0 : vector<24x128xf32>
    %20 = vector.broadcast %7 : f32 to vector<24x128xf32>
    %21 = arith.addf %19, %20 : vector<24x128xf32>
    %cst = arith.constant dense<0xFF800000> : vector<128xf32>
    %22 = vector.multi_reduction <maximumf>, %17, %cst [0] : vector<24x128xf32> to vector<128xf32>
    %23 = vector.shape_cast %22 : vector<128xf32> to vector<1x128xf32>
    %cst_2 = arith.constant dense<0x7F800000> : vector<128xf32>
    %24 = vector.multi_reduction <minimumf>, %17, %cst_2 [0] : vector<24x128xf32> to vector<128xf32>
    %25 = vector.shape_cast %24 : vector<128xf32> to vector<1x128xf32>
    %cst_3 = arith.constant 0.000000e+00 : f32
    %26 = vector.broadcast %cst_3 : f32 to vector<16x128xf32>
    %27 = arith.cmpf oge, %13, %26 : vector<16x128xf32>
    %28 = vector.shape_cast %23 : vector<1x128xf32> to vector<1x128xf32>
    %29 = vector.broadcast %28 : vector<1x128xf32> to vector<16x128xf32>
    %30 = vector.shape_cast %25 : vector<1x128xf32> to vector<1x128xf32>
    %31 = vector.broadcast %30 : vector<1x128xf32> to vector<16x128xf32>
    %32 = arith.select %27, %29, %31 : vector<16x128xi1>, vector<16x128xf32>
    %33 = arith.mulf %13, %32 : vector<16x128xf32>
    %34 = vector.shape_cast %13 : vector<16x128xf32> to vector<16x1x128xf32>
    %35 = vector.shape_cast %17 : vector<24x128xf32> to vector<1x24x128xf32>
    %36 = vector.broadcast %34 : vector<16x1x128xf32> to vector<16x24x128xf32>
    %37 = vector.broadcast %35 : vector<1x24x128xf32> to vector<16x24x128xf32>
    %38 = arith.mulf %36, %37 : vector<16x24x128xf32>
    %39 = vector.shape_cast %33 : vector<16x128xf32> to vector<16x1x128xf32>
    %40 = vector.broadcast %39 : vector<16x1x128xf32> to vector<16x24x128xf32>
    %41 = arith.subf %38, %40 : vector<16x24x128xf32>
    %42 = math.exp %41 : vector<16x24x128xf32>
    %43 = vector.shape_cast %21 : vector<24x128xf32> to vector<1x24x128xf32>
    %44 = vector.broadcast %43 : vector<1x24x128xf32> to vector<16x24x128xf32>
    %45 = arith.mulf %42, %44 : vector<16x24x128xf32>
    %cst_4 = arith.constant dense<0.000000e+00> : vector<16x128xf32>
    %46 = vector.multi_reduction <add>, %45, %cst_4 [1] : vector<16x24x128xf32> to vector<16x128xf32>
    %cst_5 = arith.constant dense<0.000000e+00> : vector<16x128xf32>
    %47 = vector.multi_reduction <add>, %42, %cst_5 [1] : vector<16x24x128xf32> to vector<16x128xf32>
    %48 = tpu.reciprocal %47 {approx = true} : vector<16x128xf32> -> vector<16x128xf32>
    %49 = arith.mulf %46, %48 : vector<16x128xf32>
    %50 = vector.broadcast %8 : f32 to vector<16x128xf32>
    %51 = arith.mulf %50, %49 : vector<16x128xf32>
    %52 = vector.broadcast %9 : f32 to vector<16x128xf32>
    %53 = arith.addf %51, %52 : vector<16x128xf32>
    %54 = vector.extract_strided_slice %0 {offsets = [0, 0], sizes = [8, 128], strides = [1, 1]} : vector<24x128xf32> to vector<8x128xf32>
    %c0_6 = arith.constant 0 : index
    %c0_7 = arith.constant 0 : index
    %55 = vector.load %arg10[%c0_6, %c0_7] : memref<24x128xf32, #tpu.memory_space<vmem>>, vector<8x128xf32>
    tpu.vector_store %arg10[%c0_6, %c0_7], %54 {strides = array<i32>} : memref<24x128xf32, #tpu.memory_space<vmem>>, vector<8x128xf32>,
    %56 = arith.mulf %1, %53 : vector<16x128xf32>
    %c8 = arith.constant 8 : index
    %c0_8 = arith.constant 0 : index
    %57 = vector.load %arg10[%c8, %c0_8] : memref<24x128xf32, #tpu.memory_space<vmem>>, vector<16x128xf32>
    tpu.vector_store %arg10[%c8, %c0_8], %56 {strides = array<i32>} : memref<24x128xf32, #tpu.memory_space<vmem>>, vector<16x128xf32>,
    %c0_9 = arith.constant 0 : index
    %c0_10 = arith.constant 0 : index
    %58 = vector.load %arg10[%c0_9, %c0_10] : memref<24x128xf32, #tpu.memory_space<vmem>>, vector<24x128xf32>
    %59 = arith.truncf %58 : vector<24x128xf32> to vector<24x128xbf16>
    %c0_11 = arith.constant 0 : index
    %c0_12 = arith.constant 0 : index
    %60 = vector.load %arg3[%c0_11, %c0_12] : memref<256x24xbf16, #tpu.memory_space<vmem>>, vector<256x24xbf16>
    %cst_13 = arith.constant dense<0.000000e+00> : vector<256x128xf32>
    %61 = tpu.matmul %60, %59, %cst_13 {dimension_numbers = #tpu.dot_dimension_numbers<[1], [0], [0], [1], [0, 0, 1, 1], [], []>} : vector<256x24xbf16>, vector<24x128xbf16>, vector<256x128xf32> -> vector<256x128xf32>
    %c0_14 = arith.constant 0 : index
    %c0_15 = arith.constant 0 : index
    %62 = vector.load %arg4[%c0_14, %c0_15] : memref<256x1xf32, #tpu.memory_space<vmem>>, vector<256x1xf32>
    %63 = vector.broadcast %62 : vector<256x1xf32> to vector<256x128xf32>
    %64 = arith.addf %61, %63 : vector<256x128xf32>
    %cst_16 = arith.constant 0.000000e+00 : f32
    %65 = vector.broadcast %cst_16 : f32 to vector<256x128xf32>
    %66 = arith.maximumf %64, %65 : vector<256x128xf32>
    %c0_17 = arith.constant 0 : index
    %c0_18 = arith.constant 0 : index
    %67 = vector.load %arg5[%c0_17, %c0_18] : memref<256x256xbf16, #tpu.memory_space<vmem>>, vector<256x256xbf16>
    %68 = arith.truncf %66 : vector<256x128xf32> to vector<256x128xbf16>
    %cst_19 = arith.constant dense<0.000000e+00> : vector<256x128xf32>
    %69 = tpu.matmul %67, %68, %cst_19 {dimension_numbers = #tpu.dot_dimension_numbers<[1], [0], [0], [1], [0, 0, 1, 1], [], []>} : vector<256x256xbf16>, vector<256x128xbf16>, vector<256x128xf32> -> vector<256x128xf32>
    %c0_20 = arith.constant 0 : index
    %c0_21 = arith.constant 0 : index
    %70 = vector.load %arg6[%c0_20, %c0_21] : memref<256x1xf32, #tpu.memory_space<vmem>>, vector<256x1xf32>
    %71 = vector.broadcast %70 : vector<256x1xf32> to vector<256x128xf32>
    %72 = arith.addf %69, %71 : vector<256x128xf32>
    %cst_22 = arith.constant 0.000000e+00 : f32
    %73 = vector.broadcast %cst_22 : f32 to vector<256x128xf32>
    %74 = arith.maximumf %72, %73 : vector<256x128xf32>
    %c0_23 = arith.constant 0 : index
    %c0_24 = arith.constant 0 : index
    %75 = vector.load %arg7[%c0_23, %c0_24] : memref<2x256xbf16, #tpu.memory_space<vmem>>, vector<2x256xbf16>
    %76 = arith.truncf %74 : vector<256x128xf32> to vector<256x128xbf16>
    %cst_25 = arith.constant dense<0.000000e+00> : vector<2x128xf32>
    %77 = tpu.matmul %75, %76, %cst_25 {dimension_numbers = #tpu.dot_dimension_numbers<[1], [0], [0], [1], [0, 0, 1, 1], [], []>} : vector<2x256xbf16>, vector<256x128xbf16>, vector<2x128xf32> -> vector<2x128xf32>
    %c0_26 = arith.constant 0 : index
    %c0_27 = arith.constant 0 : index
    %78 = vector.load %arg8[%c0_26, %c0_27] : memref<2x1xf32, #tpu.memory_space<vmem>>, vector<2x1xf32>
    %79 = vector.broadcast %78 : vector<2x1xf32> to vector<2x128xf32>
    %80 = arith.addf %77, %79 : vector<2x128xf32>
    %81 = math.tanh %80 : vector<2x128xf32>
    %82 = tpu.iota {dimensions = array<i32: 0>} : vector<2x128xi32>
    %c0_i32 = arith.constant 0 : i32
    %83 = vector.broadcast %c0_i32 : i32 to vector<2x128xi32>
    %84 = arith.cmpi eq, %82, %83 : vector<2x128xi32>
    %cst_28 = arith.constant 5.000000e-01 : f32
    %85 = vector.broadcast %cst_28 : f32 to vector<2x128xf32>
    %86 = arith.mulf %85, %81 : vector<2x128xf32>
    %cst_29 = arith.constant 5.000000e-01 : f32
    %87 = vector.broadcast %cst_29 : f32 to vector<2x128xf32>
    %88 = arith.addf %86, %87 : vector<2x128xf32>
    %89 = arith.select %84, %88, %81 : vector<2x128xi1>, vector<2x128xf32>
    %c0_30 = arith.constant 0 : index
    %c0_31 = arith.constant 0 : index
    %90 = vector.load %arg9[%c0_30, %c0_31] : memref<2x128xf32, #tpu.memory_space<vmem>>, vector<2x128xf32>
    tpu.vector_store %arg9[%c0_30, %c0_31], %89 {strides = array<i32>} : memref<2x128xf32, #tpu.memory_space<vmem>>, vector<2x128xf32>,
    return
  }
  func.func @transform_0(%arg0: i32) -> (i32, i32) {
    %c0_i32 = arith.constant 0 : i32
    %c0_i32_0 = arith.constant 0 : i32
    return %c0_i32, %arg0 : i32, i32
  }
  func.func @transform_1(%arg0: i32) -> i32 {
    %c0_i32 = arith.constant 0 : i32
    %c0_i32_0 = arith.constant 0 : i32
    return %c0_i32 : i32
  }
  func.func @transform_2(%arg0: i32) -> (i32, i32) {
    %c0_i32 = arith.constant 0 : i32
    %c0_i32_0 = arith.constant 0 : i32
    %c0_i32_1 = arith.constant 0 : i32
    return %c0_i32, %c0_i32_0 : i32, i32
  }
  func.func @transform_3(%arg0: i32) -> (i32, i32) {
    %c0_i32 = arith.constant 0 : i32
    %c0_i32_0 = arith.constant 0 : i32
    %c0_i32_1 = arith.constant 0 : i32
    return %c0_i32, %c0_i32_0 : i32, i32
  }
  func.func @transform_4(%arg0: i32) -> (i32, i32) {
    %c0_i32 = arith.constant 0 : i32
    %c0_i32_0 = arith.constant 0 : i32
    %c0_i32_1 = arith.constant 0 : i32
    return %c0_i32, %c0_i32_0 : i32, i32
  }
  func.func @transform_5(%arg0: i32) -> (i32, i32) {
    %c0_i32 = arith.constant 0 : i32
    %c0_i32_0 = arith.constant 0 : i32
    %c0_i32_1 = arith.constant 0 : i32
    return %c0_i32, %c0_i32_0 : i32, i32
  }
  func.func @transform_6(%arg0: i32) -> (i32, i32) {
    %c0_i32 = arith.constant 0 : i32
    %c0_i32_0 = arith.constant 0 : i32
    %c0_i32_1 = arith.constant 0 : i32
    return %c0_i32, %c0_i32_0 : i32, i32
  }
  func.func @transform_7(%arg0: i32) -> (i32, i32) {
    %c0_i32 = arith.constant 0 : i32
    %c0_i32_0 = arith.constant 0 : i32
    %c0_i32_1 = arith.constant 0 : i32
    return %c0_i32, %c0_i32_0 : i32, i32
  }
  func.func @transform_8(%arg0: i32) -> (i32, i32) {
    %c0_i32 = arith.constant 0 : i32
    %c0_i32_0 = arith.constant 0 : i32
    return %c0_i32, %arg0 : i32, i32
  }
}

</mosaic_0001>

<llo_original>
// kernel: tpu_custom_call.1
$region0: #{tpu_custom_call.1}
  #allocation0 [shape = 'u32[]', space=smem, size = 0x4, offset = 0x4, fixed_abs, tag = 'smem constant byte address 0x4 - core index']
  #allocation1 [shape = 'u32[144,128]{1,0:T(1,128)}', space=vmem, size = 0x12000, scoped, tag = 'internal scratch']
  #allocation2 [shape = 'f32[24,128]{1,0:T(8,128)}', space=vmem, size = 0x3000, scoped, tag = 'scratch operand']
  %s0 = inlined_call_operand.vmem [shape: f32[24,256], index: 0, kind: input, shape index: {}]
  %s1 = inlined_call_operand.vmem [shape: f32[8], index: 1, kind: input, shape index: {}]
  %s2 = inlined_call_operand.vmem [shape: bf16[256,24], index: 2, kind: input, shape index: {}]
  %s3 = inlined_call_operand.vmem [shape: f32[256,1], index: 3, kind: input, shape index: {}]
  %s4 = inlined_call_operand.vmem [shape: bf16[256,256], index: 4, kind: input, shape index: {}]
  %s5 = inlined_call_operand.vmem [shape: f32[256,1], index: 5, kind: input, shape index: {}]
  %s6 = inlined_call_operand.vmem [shape: bf16[2,256], index: 6, kind: input, shape index: {}]
  %s7 = inlined_call_operand.vmem [shape: f32[2,1], index: 7, kind: input, shape index: {}]
  %s8 = inlined_call_operand.hbm [shape: f32[2,256], index: 8, kind: output, shape index: {}]
  %s9 = sld [smem:[#allocation0]]
  $region107: #{tpu_custom_call.1} parent=0
    _
  %s11 = ssub.s32 1, %s9
  %s12 = scalar_select 0, %s11, %s9
  $region1: #{tpu_custom_call.1} parent=0
    #allocation3 [shape = 'u8[24576]{0}', space=vmem, size = 0x6000, scoped, tag = 'input window, operand 0']
    #allocation4 [shape = 'u8[512]{0}', space=smem, size = 0x200, scoped, tag = 'input window, operand 1, single buffered']
    #allocation5 [shape = 's32[2]{0}', space=sflag, size = 0x8, scoped, tag = 'scoped memory for tpu_custom_call.1']
    #allocation6 [shape = 's32[2]{0}', space=sflag, size = 0x8, scoped, tag = 'scoped memory for tpu_custom_call.1']
    #allocation7 [shape = 'u8[2048]{0}', space=vmem, size = 0x800, scoped, tag = 'output window, operand 0']
    %13 = vsyncpa [#allocation6], 0
    %14 = vsyncpa [#allocation5], 0
    %s15 = scalar_lea.sflag [#allocation5], 1
    %16 = vsyncpa %s15, 0
    loop: start=0, step=1, limit=4
    $region2: #{tpu_custom_call.1} parent=1 // loop_pre_header
      _
    $region3: #{tpu_custom_call.1} parent=1 // loop_header
      %s18 = sphi 0, %s22
      %p19 = scmp.ge.s32.totalorder %s18, 4
      %s28 = sphi 0, %s30
      %s31 = sphi 0, %s28
      %s32 = sphi 0, %s31
      %s48 = sphi 0, %s32
      %s52 = sphi 0, %s52
      %s54 = sphi 0, %s52
      %s55 = sphi 0, %s54
      %s69 = sphi 0, %s55
      %s73 = sphi 0, %s73
      %s75 = sphi 0, %s73
      %s76 = sphi 0, %s75
      %s90 = sphi 0, %s76
      %s94 = sphi 0, %s94
      %s96 = sphi 0, %s94
      %s97 = sphi 0, %s96
      %s111 = sphi 0, %s97
      %s115 = sphi 0, %s115
      %s117 = sphi 0, %s115
      %s118 = sphi 0, %s117
      %s132 = sphi 0, %s118
      %s136 = sphi 0, %s136
      %s138 = sphi 0, %s136
      %s139 = sphi 0, %s138
      %s153 = sphi 0, %s139
      %s157 = sphi 0, %s157
      %s159 = sphi 0, %s157
      %s160 = sphi 0, %s159
      %s174 = sphi 0, %s160
      %s178 = sphi 0, %s178
      %s180 = sphi 0, %s178
      %s181 = sphi 0, %s180
      %s195 = sphi 0, %s181
      %s201 = sphi 0, %s203
      %s204 = sphi 0, %s201
      %s205 = sphi 0, %s204
      %s221 = sphi 0, %s205
    $region4: #{tpu_custom_call.1} parent=1 // loop_header_branch
      %21 = sbr.rel (%p19) target = $region8
    $region5: #{tpu_custom_call.1} parent=1 // loop_body
      %s23 = ssub.s32 %s18, 1
      %s24 = ssub.s32 %s18, 2
      %s25 = sadd.s32 %s18, 1
      %s26 = ssub.s32 %s18, %s25
      %p27 = scmp.eq.s32.totalorder %s26, 0
      %s29 = sadd.s32 %s28, 1
      %s30 = scalar_select %p27, %s28, %s29
      %p33 = pneg %p27
      %p34 = scmp.eq.s32.totalorder %s18, 1
      %p35 = por %p33, %p34
      %p36 = scmp.ne.s32.totalorder %s28, %s31
      %p37 = scmp.eq.s32.totalorder %s18, 0
      %p38 = por %p36, %p37
      %p39 = scmp.ne.s32.totalorder %s28, %s31
      %p40 = scmp.eq.s32.totalorder %s23, 1
      %p41 = por %p39, %p40
      %p42 = scmp.ne.s32.totalorder %s31, %s32
      %p43 = scmp.eq.s32.totalorder %s23, 0
      %p44 = por %p42, %p43
      %p45 = scmp.ne.s32.totalorder %s31, %s32
      %p46 = scmp.eq.s32.totalorder %s24, 1
      %p47 = por %p45, %p46
      %p49 = scmp.ne.s32.totalorder %s32, %s48
      %p50 = scmp.eq.s32.totalorder %s24, 0
      %p51 = por %p49, %p50
      %s53 = sadd.s32 %s52, 1
      %p56 = scmp.eq.s32.totalorder %s18, 1
      %p57 = scmp.ne.s32.totalorder %s52, %s54
      %p58 = scmp.eq.s32.totalorder %s18, 0
      %p59 = por %p57, %p58
      %p60 = scmp.ne.s32.totalorder %s52, %s54
      %p61 = scmp.eq.s32.totalorder %s23, 1
      %p62 = por %p60, %p61
      %p63 = scmp.ne.s32.totalorder %s54, %s55
      %p64 = scmp.eq.s32.totalorder %s23, 0
      %p65 = por %p63, %p64
      %p66 = scmp.ne.s32.totalorder %s54, %s55
      %p67 = scmp.eq.s32.totalorder %s24, 1
      %p68 = por %p66, %p67
      %p70 = scmp.ne.s32.totalorder %s55, %s69
      %p71 = scmp.eq.s32.totalorder %s24, 0
      %p72 = por %p70, %p71
      %s74 = sadd.s32 %s73, 1
      %p77 = scmp.eq.s32.totalorder %s18, 1
      %p78 = scmp.ne.s32.totalorder %s73, %s75
      %p79 = scmp.eq.s32.totalorder %s18, 0
      %p80 = por %p78, %p79
      %p81 = scmp.ne.s32.totalorder %s73, %s75
      %p82 = scmp.eq.s32.totalorder %s23, 1
      %p83 = por %p81, %p82
      %p84 = scmp.ne.s32.totalorder %s75, %s76
      %p85 = scmp.eq.s32.totalorder %s23, 0
      %p86 = por %p84, %p85
      %p87 = scmp.ne.s32.totalorder %s75, %s76
      %p88 = scmp.eq.s32.totalorder %s24, 1
      %p89 = por %p87, %p88
      %p91 = scmp.ne.s32.totalorder %s76, %s90
      %p92 = scmp.eq.s32.totalorder %s24, 0
      %p93 = por %p91, %p92
      %s95 = sadd.s32 %s94, 1
      %p98 = scmp.eq.s32.totalorder %s18, 1
      %p99 = scmp.ne.s32.totalorder %s94, %s96
      %p100 = scmp.eq.s32.totalorder %s18, 0
      %p101 = por %p99, %p100
      %p102 = scmp.ne.s32.totalorder %s94, %s96
      %p103 = scmp.eq.s32.totalorder %s23, 1
      %p104 = por %p102, %p103
      %p105 = scmp.ne.s32.totalorder %s96, %s97
      %p106 = scmp.eq.s32.totalorder %s23, 0
      %p107 = por %p105, %p106
      %p108 = scmp.ne.s32.totalorder %s96, %s97
      %p109 = scmp.eq.s32.totalorder %s24, 1
      %p110 = por %p108, %p109
      %p112 = scmp.ne.s32.totalorder %s97, %s111
      %p113 = scmp.eq.s32.totalorder %s24, 0
      %p114 = por %p112, %p113
      %s116 = sadd.s32 %s115, 1
      %p119 = scmp.eq.s32.totalorder %s18, 1
      %p120 = scmp.ne.s32.totalorder %s115, %s117
      %p121 = scmp.eq.s32.totalorder %s18, 0
      %p122 = por %p120, %p121
      %p123 = scmp.ne.s32.totalorder %s115, %s117
      %p124 = scmp.eq.s32.totalorder %s23, 1
      %p125 = por %p123, %p124
      %p126 = scmp.ne.s32.totalorder %s117, %s118
      %p127 = scmp.eq.s32.totalorder %s23, 0
      %p128 = por %p126, %p127
      %p129 = scmp.ne.s32.totalorder %s117, %s118
      %p130 = scmp.eq.s32.totalorder %s24, 1
      %p131 = por %p129, %p130
      %p133 = scmp.ne.s32.totalorder %s118, %s132
      %p134 = scmp.eq.s32.totalorder %s24, 0
      %p135 = por %p133, %p134
      %s137 = sadd.s32 %s136, 1
      %p140 = scmp.eq.s32.totalorder %s18, 1
      %p141 = scmp.ne.s32.totalorder %s136, %s138
      %p142 = scmp.eq.s32.totalorder %s18, 0
      %p143 = por %p141, %p142
      %p144 = scmp.ne.s32.totalorder %s136, %s138
      %p145 = scmp.eq.s32.totalorder %s23, 1
      %p146 = por %p144, %p145
      %p147 = scmp.ne.s32.totalorder %s138, %s139
      %p148 = scmp.eq.s32.totalorder %s23, 0
      %p149 = por %p147, %p148
      %p150 = scmp.ne.s32.totalorder %s138, %s139
      %p151 = scmp.eq.s32.totalorder %s24, 1
      %p152 = por %p150, %p151
      %p154 = scmp.ne.s32.totalorder %s139, %s153
      %p155 = scmp.eq.s32.totalorder %s24, 0
      %p156 = por %p154, %p155
      %s158 = sadd.s32 %s157, 1
      %p161 = scmp.eq.s32.totalorder %s18, 1
      %p162 = scmp.ne.s32.totalorder %s157, %s159
      %p163 = scmp.eq.s32.totalorder %s18, 0
      %p164 = por %p162, %p163
      %p165 = scmp.ne.s32.totalorder %s157, %s159
      %p166 = scmp.eq.s32.totalorder %s23, 1
      %p167 = por %p165, %p166
      %p168 = scmp.ne.s32.totalorder %s159, %s160
      %p169 = scmp.eq.s32.totalorder %s23, 0
      %p170 = por %p168, %p169
      %p171 = scmp.ne.s32.totalorder %s159, %s160
      %p172 = scmp.eq.s32.totalorder %s24, 1
      %p173 = por %p171, %p172
      %p175 = scmp.ne.s32.totalorder %s160, %s174
      %p176 = scmp.eq.s32.totalorder %s24, 0
      %p177 = por %p175, %p176
      %s179 = sadd.s32 %s178, 1
      %p182 = scmp.eq.s32.totalorder %s18, 1
      %p183 = scmp.ne.s32.totalorder %s178, %s180
      %p184 = scmp.eq.s32.totalorder %s18, 0
      %p185 = por %p183, %p184
      %p186 = scmp.ne.s32.totalorder %s178, %s180
      %p187 = scmp.eq.s32.totalorder %s23, 1
      %p188 = por %p186, %p187
      %p189 = scmp.ne.s32.totalorder %s180, %s181
      %p190 = scmp.eq.s32.totalorder %s23, 0
      %p191 = por %p189, %p190
      %p192 = scmp.ne.s32.totalorder %s180, %s181
      %p193 = scmp.eq.s32.totalorder %s24, 1
      %p194 = por %p192, %p193
      %p196 = scmp.ne.s32.totalorder %s181, %s195
      %p197 = scmp.eq.s32.totalorder %s24, 0
      %p198 = por %p196, %p197
      %s199 = ssub.s32 %s18, %s25
      %p200 = scmp.eq.s32.totalorder %s199, 0
      %s202 = sadd.s32 %s201, 1
      %s203 = scalar_select %p200, %s201, %s202
      %p206 = pneg %p200
      %p207 = scmp.eq.s32.totalorder %s18, 1
      %p208 = por %p206, %p207
      %p209 = scmp.ne.s32.totalorder %s201, %s204
      %p210 = scmp.eq.s32.totalorder %s18, 0
      %p211 = por %p209, %p210
      %p212 = scmp.ne.s32.totalorder %s201, %s204
      %p213 = scmp.eq.s32.totalorder %s23, 1
      %p214 = por %p212, %p213
      %p215 = scmp.ne.s32.totalorder %s204, %s205
      %p216 = scmp.eq.s32.totalorder %s23, 0
      %p217 = por %p215, %p216
      %p218 = scmp.ne.s32.totalorder %s204, %s205
      %p219 = scmp.eq.s32.totalorder %s24, 1
      %p220 = por %p218, %p219
      %p222 = scmp.ne.s32.totalorder %s205, %s221
      %p223 = scmp.eq.s32.totalorder %s24, 0
      %p224 = por %p222, %p223
      %p225 = scmp.le.s32.totalorder 1, %s18
      %p226 = scmp.lt.s32.totalorder %s18, 3
      %p227 = pnand %p225, %p226
      %p228 = pneg %p227
      // Predicated region
      $region9: #{tpu_custom_call.1} parent=5 // pred_check
        _
      $region10: #{tpu_custom_call.1} parent=5 // pred_check_branch
        %230 = sbr.rel (%p227) target = $region12
      $region11: #{tpu_custom_call.1} parent=5 // pred_region
        %s231 = ssub.s32 %s18, 1
        // Predicated region
        $region13: #{tpu_custom_call.1} parent=11 // pred_check
          %p232 = pneg %p65
        $region14: #{tpu_custom_call.1} parent=11 // pred_check_branch
          %234 = sbr.rel (%p232) target = $region16
        $region15: #{tpu_custom_call.1} parent=11 // pred_region
          %s236 = ssub.s32 16, 16
          %237 = vsyncadd [#allocation6], %s236
          %s239 = sshll.u32 %s1, 4
          %s240 = int_to_ptr.vmem [resolvable:$true] %s239
          %242 = dma.vmem_to_smem %s240, 16, [#allocation4], [#allocation6]
        $region16: #{tpu_custom_call.1} parent=11 // pred_fallthru
          _
        // Predicated region
        $region17: #{tpu_custom_call.1} parent=11 // pred_check
          %p243 = pneg %p86
        $region18: #{tpu_custom_call.1} parent=11 // pred_check_branch
          %245 = sbr.rel (%p243) target = $region20
        $region19: #{tpu_custom_call.1} parent=11 // pred_region
          _
        $region20: #{tpu_custom_call.1} parent=11 // pred_fallthru
          _
        // Predicated region
        $region21: #{tpu_custom_call.1} parent=11 // pred_check
          %p246 = pneg %p107
        $region22: #{tpu_custom_call.1} parent=11 // pred_check_branch
          %248 = sbr.rel (%p246) target = $region24
        $region23: #{tpu_custom_call.1} parent=11 // pred_region
          _
        $region24: #{tpu_custom_call.1} parent=11 // pred_fallthru
          _
        // Predicated region
        $region25: #{tpu_custom_call.1} parent=11 // pred_check
          %p249 = pneg %p128
        $region26: #{tpu_custom_call.1} parent=11 // pred_check_branch
          %251 = sbr.rel (%p249) target = $region28
        $region27: #{tpu_custom_call.1} parent=11 // pred_region
          _
        $region28: #{tpu_custom_call.1} parent=11 // pred_fallthru
          _
        // Predicated region
        $region29: #{tpu_custom_call.1} parent=11 // pred_check
          %p252 = pneg %p149
        $region30: #{tpu_custom_call.1} parent=11 // pred_check_branch
          %254 = sbr.rel (%p252) target = $region32
        $region31: #{tpu_custom_call.1} parent=11 // pred_region
          _
        $region32: #{tpu_custom_call.1} parent=11 // pred_fallthru
          _
        // Predicated region
        $region33: #{tpu_custom_call.1} parent=11 // pred_check
          %p255 = pneg %p170
        $region34: #{tpu_custom_call.1} parent=11 // pred_check_branch
          %257 = sbr.rel (%p255) target = $region36
        $region35: #{tpu_custom_call.1} parent=11 // pred_region
          _
        $region36: #{tpu_custom_call.1} parent=11 // pred_fallthru
          _
        // Predicated region
        $region37: #{tpu_custom_call.1} parent=11 // pred_check
          %p258 = pneg %p191
        $region38: #{tpu_custom_call.1} parent=11 // pred_check_branch
          %260 = sbr.rel (%p258) target = $region40
        $region39: #{tpu_custom_call.1} parent=11 // pred_region
          _
        $region40: #{tpu_custom_call.1} parent=11 // pred_fallthru
          _
      $region12: #{tpu_custom_call.1} parent=5 // pred_fallthru
        _
      %p261 = scmp.lt.s32.totalorder %s18, 2
      // Predicated region
      $region41: #{tpu_custom_call.1} parent=5 // pred_check
        %p262 = pneg %p261
      $region42: #{tpu_custom_call.1} parent=5 // pred_check_branch
        %264 = sbr.rel (%p262) target = $region44
      $region43: #{tpu_custom_call.1} parent=5 // pred_region
        // Predicated region
        $region45: #{tpu_custom_call.1} parent=43 // pred_check
          %p265 = pneg %p38
        $region46: #{tpu_custom_call.1} parent=43 // pred_check_branch
          %267 = sbr.rel (%p265) target = $region48
        $region47: #{tpu_custom_call.1} parent=43 // pred_region
          %s268 = sand.u32 %s28, 1
          %s269 = sand.u32 %s28, 1
          %s270 = smul.addr %s269, 24
          %s271 = scalar_lea.vmem [#allocation3], %s270
          %s272 = smul.addr %s18, 8
          %s273 = scalar_lea.vmem %s0, %s272
          // Predicated region
          $region49: #{tpu_custom_call.1} parent=47 // pred_check
            _
          $region50: #{tpu_custom_call.1} parent=47 // pred_check_branch
            %275 = sbr.rel (0) target = $region52
          $region51: #{tpu_custom_call.1} parent=47 // pred_region
            // Predicated region
            $region53: #{tpu_custom_call.1} parent=51 // pred_check
              _
            $region54: #{tpu_custom_call.1} parent=51 // pred_check_branch
              %277 = sbr.rel (0) target = $region56
            $region55: #{tpu_custom_call.1} parent=51 // pred_region
              // Predicated region
              $region68: #{tpu_custom_call.1} parent=55 // pred_check
                _
              $region69: #{tpu_custom_call.1} parent=55 // pred_check_branch
                %296 = sbr.rel (0) target = $region71
              $region70: #{tpu_custom_call.1} parent=55 // pred_region
                loop: start=0, step=1, limit=1
                $region72: #{tpu_custom_call.1} parent=70 // loop_pre_header
                  _
                $region73: #{tpu_custom_call.1} parent=70 // loop_header
                  %s298 = sphi 0, %s302
                  %p299 = scmp.ge.s32.totalorder %s298, 1
                  %s303 = sphi %s273, %s273
                  %s304 = sphi %s271, %s271
                $region74: #{tpu_custom_call.1} parent=70 // loop_header_branch
                  %301 = sbr.rel (%p299) target = $region78
                $region75: #{tpu_custom_call.1} parent=70 // loop_body
                  %v305 = vld [vmem:[%s303] sm:$0xff]
                  %306 = vst [vmem:[%s304] sm:$0xff] %v305
                  %v307 = vld [vmem:[%s303 + $0x10] sm:$0xff]
                  %308 = vst [vmem:[%s304 + $0x8] sm:$0xff] %v307
                  %v309 = vld [vmem:[%s303 + $0x20] sm:$0xff]
                  %310 = vst [vmem:[%s304 + $0x10] sm:$0xff] %v309
                $region76: #{tpu_custom_call.1} parent=70 // loop_footer
                  %s302 = sadd.s32 1, %s298
                $region77: #{tpu_custom_call.1} parent=70 // loop_footer_branch
                  %297 = sbr.rel target = $region73
                $region78: #{tpu_custom_call.1} parent=70 // loop_exit
                  _
              $region71: #{tpu_custom_call.1} parent=55 // pred_fallthru
                _
              // Predicated region
              $region79: #{tpu_custom_call.1} parent=55 // pred_check
                _
              $region80: #{tpu_custom_call.1} parent=55 // pred_check_branch
                %312 = sbr.rel target = $region82
              $region81: #{tpu_custom_call.1} parent=55 // pred_region
                _
              $region82: #{tpu_custom_call.1} parent=55 // pred_fallthru
                _
            $region56: #{tpu_custom_call.1} parent=51 // pred_fallthru
              _
            // Predicated region
            $region57: #{tpu_custom_call.1} parent=51 // pred_check
              _
            $region58: #{tpu_custom_call.1} parent=51 // pred_check_branch
              %279 = sbr.rel target = $region60
            $region59: #{tpu_custom_call.1} parent=51 // pred_region
              loop: start=0, step=1, limit=1
              $region61: #{tpu_custom_call.1} parent=59 // loop_pre_header
                _
              $region62: #{tpu_custom_call.1} parent=59 // loop_header
                %s282 = sphi 0, %s286
                %p283 = scmp.ge.s32.totalorder %s282, 1
                %s287 = sphi %s273, %s273
                %s288 = sphi %s271, %s271
              $region63: #{tpu_custom_call.1} parent=59 // loop_header_branch
                %285 = sbr.rel (%p283) target = $region67
              $region64: #{tpu_custom_call.1} parent=59 // loop_body
                %v289 = vld [vmem:[%s287] sm:$0xff]
                %290 = vst [vmem:[%s288] sm:$0xff] %v289
                %v291 = vld [vmem:[%s287 + $0x10] sm:$0xff]
                %292 = vst [vmem:[%s288 + $0x8] sm:$0xff] %v291
                %v293 = vld [vmem:[%s287 + $0x20] sm:$0xff]
                %294 = vst [vmem:[%s288 + $0x10] sm:$0xff] %v293
              $region65: #{tpu_custom_call.1} parent=59 // loop_footer
                %s286 = sadd.s32 1, %s282
              $region66: #{tpu_custom_call.1} parent=59 // loop_footer_branch
                %281 = sbr.rel target = $region62
              $region67: #{tpu_custom_call.1} parent=59 // loop_exit
                _
            $region60: #{tpu_custom_call.1} parent=51 // pred_fallthru
              _
          $region52: #{tpu_custom_call.1} parent=47 // pred_fallthru
            _
          %313 = vnop
        $region48: #{tpu_custom_call.1} parent=43 // pred_fallthru
          _
      $region44: #{tpu_custom_call.1} parent=5 // pred_fallthru
        _
      %p314 = scmp.le.s32.totalorder 1, %s18
      %p315 = scmp.lt.s32.totalorder %s18, 3
      %p316 = pnand %p314, %p315
      %p317 = pneg %p316
      // Predicated region
      $region83: #{tpu_custom_call.1} parent=5 // pred_check
        _
      $region84: #{tpu_custom_call.1} parent=5 // pred_check_branch
        %319 = sbr.rel (%p316) target = $region86
      $region85: #{tpu_custom_call.1} parent=5 // pred_region
        %s320 = ssub.s32 %s18, 1
        %s321 = sand.u32 %s31, 1
        %s322 = sand.u32 %s31, 1
        %s323 = smul.addr %s322, 24
        %s324 = scalar_lea.vmem [#allocation3], %s323
        // Predicated region
        $region87: #{tpu_custom_call.1} parent=85 // pred_check
          %p325 = pneg %p44
        $region88: #{tpu_custom_call.1} parent=85 // pred_check_branch
          %327 = sbr.rel (%p325) target = $region90
        $region89: #{tpu_custom_call.1} parent=85 // pred_region
          _
        $region90: #{tpu_custom_call.1} parent=85 // pred_fallthru
          _
        // Predicated region
        $region91: #{tpu_custom_call.1} parent=85 // pred_check
          %p328 = pneg %p65
        $region92: #{tpu_custom_call.1} parent=85 // pred_check_branch
          %330 = sbr.rel (%p328) target = $region94
        $region93: #{tpu_custom_call.1} parent=85 // pred_region
          %331 = dma.done [#allocation6], 16
        $region94: #{tpu_custom_call.1} parent=85 // pred_fallthru
          _
        %332 = sfence
        %s333 = sand.u32 %s31, 1
        %s334 = sand.u32 %s31, 1
        %s335 = smul.addr %s334, 24
        %s336 = scalar_lea.vmem [#allocation3], %s335
        %p337 = pneg %p44
        %p338 = pneg %p41
        %p339 = pneg %p65
        %p340 = pneg %p62
        %p341 = pneg %p86
        %p342 = pneg %p83
        %p343 = pneg %p107
        %p344 = pneg %p104
        %p345 = pneg %p128
        %p346 = pneg %p125
        %p347 = pneg %p149
        %p348 = pneg %p146
        %p349 = pneg %p170
        %p350 = pneg %p167
        %p351 = pneg %p191
        %p352 = pneg %p188
        %p353 = pneg %p217
        %p354 = pneg %p214
        %s355 = sand.u32 %s204, 1
        %s356 = scalar_lea.sflag [#allocation5], %s355
        %s357 = sand.u32 %s204, 1
        %s358 = smul.addr %s357, 2
        %s359 = scalar_lea.vmem [#allocation7], %s358
        %v361 = vld [vmem:[%s324] sm:$0xff]
        %v362 = vld [vmem:[%s324 + $0x8] sm:$0xff]
        %v363 = vld [vmem:[%s324 + $0x10] sm:$0xff]
        %s364 = sld [smem:[#allocation4]]
        %s365 = sld [smem:[#allocation4 + $0x1]]
        %s366 = sld [smem:[#allocation4 + $0x2]]
        %s367 = sld [smem:[#allocation4 + $0x3]]
        %s368 = sld [smem:[#allocation4 + $0x4]]
        %s369 = sld [smem:[#allocation4 + $0x5]]
        %s370 = sld [smem:[#allocation4 + $0x6]]
        %s371 = sld [smem:[#allocation4 + $0x7]]
        %v372 = vstv %s364
        %v373 = vmul.f32 %v372, %v362
        %v374 = vmul.f32 %v372, %v363
        %v375 = vstv %s367
        %v376 = vadd.f32 %v373, %v375
        %v377 = vadd.f32 %v374, %v375
        %v378 = vstv %s365
        %v379 = vmul.f32 %v378, %v361
        %v380 = vmul.f32 %v378, %v362
        %v381 = vmul.f32 %v378, %v363
        %v382 = vstv %s368
        %v383 = vadd.f32 %v379, %v382
        %v384 = vadd.f32 %v380, %v382
        %v385 = vadd.f32 %v381, %v382
        %v386 = vstv %s366
        %v387 = vmul.f32 %v386, %v361
        %v388 = vmul.f32 %v386, %v362
        %v389 = vmul.f32 %v386, %v363
        %v390 = vstv %s369
        %v391 = vadd.f32 %v387, %v390
        %v392 = vadd.f32 %v388, %v390
        %v393 = vadd.f32 %v389, %v390
        %v394 = vmax.f32 %v383, %v384
        %v395 = vmax.f32 %v394, %v385
        %v396 = vrot.slane %v395, 4
        %v397 = vmax.f32 %v395, %v396
        %v398 = vrot.slane %v397, 2
        %v399 = vmax.f32 %v397, %v398
        %v400 = vrot.slane %v399, 1
        %v401 = vmax.f32 %v399, %v400
        %v402 = vmin.f32 %v383, %v384
        %v403 = vmin.f32 %v402, %v385
        %v404 = vrot.slane %v403, 4
        %v405 = vmin.f32 %v403, %v404
        %v406 = vrot.slane %v405, 2
        %v407 = vmin.f32 %v405, %v406
        %v408 = vrot.slane %v407, 1
        %v409 = vmin.f32 %v407, %v408
        %vm410 = vcmp.ge.f32.partialorder %v376, 0.0
        %vm411 = vcmp.ge.f32.partialorder %v377, 0.0
        %v412 = vsel %vm410, %v401, %v409
        %v413 = vsel %vm411, %v401, %v409
        %v414 = vmul.f32 %v376, %v412
        %v415 = vmul.f32 %v377, %v413
        %v418 = vcombine.high %v376, %v376
        %v420 = vunpack.c.l.s4 1966171168
        %v421 = vunpack.c.0.s8 %v420
        %v422 = vlaneseq
        %v423 = vshrl.u32 %v422, 7
        %v424 = vsub.s32 %v421, %v423
        %v425 = vrot.slane %v376, %v424
        %v427 = vunpack.c.l.s4 1966171168
        %v428 = vunpack.c.0.s8 %v427
        %v429 = vlaneseq
        %v430 = vshrl.u32 %v429, 7
        %v431 = vsub.s32 %v428, %v430
        %v432 = vrot.slane %v418, %v431
        %v433 = vcombine.high %v425, %v425
        %v434 = vcombine.high %v432, %v432
        %v436 = vunpack.c.l.s4 1966171168
        %v437 = vunpack.c.0.s8 %v436
        %v438 = vlaneseq
        %v439 = vshrl.u32 %v438, 7
        %v440 = vsub.s32 %v437, %v439
        %v441 = vrot.slane %v425, %v440
        %v443 = vunpack.c.l.s4 1966171168
        %v444 = vunpack.c.0.s8 %v443
        %v445 = vlaneseq
        %v446 = vshrl.u32 %v445, 7
        %v447 = vsub.s32 %v444, %v446
        %v448 = vrot.slane %v432, %v447
        %v450 = vunpack.c.l.s4 1966171168
        %v451 = vunpack.c.0.s8 %v450
        %v452 = vlaneseq
        %v453 = vshrl.u32 %v452, 7
        %v454 = vsub.s32 %v451, %v453
        %v455 = vrot.slane %v433, %v454
        %v457 = vunpack.c.l.s4 1966171168
        %v458 = vunpack.c.0.s8 %v457
        %v459 = vlaneseq
        %v460 = vshrl.u32 %v459, 7
        %v461 = vsub.s32 %v458, %v460
        %v462 = vrot.slane %v434, %v461
        %v463 = vcombine.high %v441, %v441
        %v464 = vcombine.high %v448, %v448
        %v465 = vcombine.high %v455, %v455
        %v466 = vcombine.high %v462, %v462
        %v467 = vcombine.high %v377, %v377
        %v469 = vunpack.c.l.s4 1966171168
        %v470 = vunpack.c.0.s8 %v469
        %v471 = vlaneseq
        %v472 = vshrl.u32 %v471, 7
        %v473 = vsub.s32 %v470, %v472
        %v474 = vrot.slane %v377, %v473
        %v476 = vunpack.c.l.s4 1966171168
        %v477 = vunpack.c.0.s8 %v476
        %v478 = vlaneseq
        %v479 = vshrl.u32 %v478, 7
        %v480 = vsub.s32 %v477, %v479
        %v481 = vrot.slane %v467, %v480
        %v482 = vcombine.high %v474, %v474
        %v483 = vcombine.high %v481, %v481
        %v485 = vunpack.c.l.s4 1966171168
        %v486 = vunpack.c.0.s8 %v485
        %v487 = vlaneseq
        %v488 = vshrl.u32 %v487, 7
        %v489 = vsub.s32 %v486, %v488
        %v490 = vrot.slane %v474, %v489
        %v492 = vunpack.c.l.s4 1966171168
        %v493 = vunpack.c.0.s8 %v492
        %v494 = vlaneseq
        %v495 = vshrl.u32 %v494, 7
        %v496 = vsub.s32 %v493, %v495
        %v497 = vrot.slane %v481, %v496
        %v499 = vunpack.c.l.s4 1966171168
        %v500 = vunpack.c.0.s8 %v499
        %v501 = vlaneseq
        %v502 = vshrl.u32 %v501, 7
        %v503 = vsub.s32 %v500, %v502
        %v504 = vrot.slane %v482, %v503
        %v506 = vunpack.c.l.s4 1966171168
        %v507 = vunpack.c.0.s8 %v506
        %v508 = vlaneseq
        %v509 = vshrl.u32 %v508, 7
        %v510 = vsub.s32 %v507, %v509
        %v511 = vrot.slane %v483, %v510
        %v512 = vcombine.high %v490, %v490
        %v513 = vcombine.high %v497, %v497
        %v514 = vcombine.high %v504, %v504
        %v515 = vcombine.high %v511, %v511
        %v516 = vlaneseq
        %v517 = vshrl.u32 %v516, 7
        %v518 = vsub.s32 0, %v517
        %v519 = vrot.slane %v441, %v518
        %v520 = vlaneseq
        %v521 = vshrl.u32 %v520, 7
        %v522 = vsub.s32 0, %v521
        %v523 = vrot.slane %v455, %v522
        %v524 = vlaneseq
        %v525 = vshrl.u32 %v524, 7
        %v526 = vsub.s32 0, %v525
        %v527 = vrot.slane %v463, %v526
        %v528 = vlaneseq
        %v529 = vshrl.u32 %v528, 7
        %v530 = vsub.s32 0, %v529
        %v531 = vrot.slane %v465, %v530
        %v532 = vlaneseq
        %v533 = vshrl.u32 %v532, 7
        %v534 = vsub.s32 0, %v533
        %v535 = vrot.slane %v448, %v534
        %v536 = vlaneseq
        %v537 = vshrl.u32 %v536, 7
        %v538 = vsub.s32 0, %v537
        %v539 = vrot.slane %v462, %v538
        %v540 = vlaneseq
        %v541 = vshrl.u32 %v540, 7
        %v542 = vsub.s32 0, %v541
        %v543 = vrot.slane %v464, %v542
        %v544 = vlaneseq
        %v545 = vshrl.u32 %v544, 7
        %v546 = vsub.s32 0, %v545
        %v547 = vrot.slane %v466, %v546
        %v548 = vlaneseq
        %v549 = vshrl.u32 %v548, 7
        %v550 = vsub.s32 0, %v549
        %v551 = vrot.slane %v490, %v550
        %v552 = vlaneseq
        %v553 = vshrl.u32 %v552, 7
        %v554 = vsub.s32 0, %v553
        %v555 = vrot.slane %v504, %v554
        %v556 = vlaneseq
        %v557 = vshrl.u32 %v556, 7
        %v558 = vsub.s32 0, %v557
        %v559 = vrot.slane %v512, %v558
        %v560 = vlaneseq
        %v561 = vshrl.u32 %v560, 7
        %v562 = vsub.s32 0, %v561
        %v563 = vrot.slane %v514, %v562
        %v564 = vlaneseq
        %v565 = vshrl.u32 %v564, 7
        %v566 = vsub.s32 0, %v565
        %v567 = vrot.slane %v497, %v566
        %v568 = vlaneseq
        %v569 = vshrl.u32 %v568, 7
        %v570 = vsub.s32 0, %v569
        %v571 = vrot.slane %v511, %v570
        %v572 = vlaneseq
        %v573 = vshrl.u32 %v572, 7
        %v574 = vsub.s32 0, %v573
        %v575 = vrot.slane %v513, %v574
        %v576 = vlaneseq
        %v577 = vshrl.u32 %v576, 7
        %v578 = vsub.s32 0, %v577
        %v579 = vrot.slane %v515, %v578
        %v596 = vmul.f32 %v519, %v383
        %v597 = vmul.f32 %v519, %v384
        %v598 = vmul.f32 %v519, %v385
        %v599 = vmul.f32 %v523, %v383
        %v600 = vmul.f32 %v523, %v384
        %v601 = vmul.f32 %v523, %v385
        %v602 = vmul.f32 %v527, %v383
        %v603 = vmul.f32 %v527, %v384
        %v604 = vmul.f32 %v527, %v385
        %v605 = vmul.f32 %v531, %v383
        %v606 = vmul.f32 %v531, %v384
        %v607 = vmul.f32 %v531, %v385
        %v608 = vmul.f32 %v535, %v383
        %v609 = vmul.f32 %v535, %v384
        %v610 = vmul.f32 %v535, %v385
        %v611 = vmul.f32 %v539, %v383
        %v612 = vmul.f32 %v539, %v384
        %v613 = vmul.f32 %v539, %v385
        %v614 = vmul.f32 %v543, %v383
        %v615 = vmul.f32 %v543, %v384
        %v616 = vmul.f32 %v543, %v385
        %v617 = vmul.f32 %v547, %v383
        %v618 = vmul.f32 %v547, %v384
        %v619 = vmul.f32 %v547, %v385
        %v620 = vmul.f32 %v551, %v383
        %v621 = vmul.f32 %v551, %v384
        %v622 = vmul.f32 %v551, %v385
        %v623 = vmul.f32 %v555, %v383
        %v624 = vmul.f32 %v555, %v384
        %v625 = vmul.f32 %v555, %v385
        %v626 = vmul.f32 %v559, %v383
        %v627 = vmul.f32 %v559, %v384
        %v628 = vmul.f32 %v559, %v385
        %v629 = vmul.f32 %v563, %v383
        %v630 = vmul.f32 %v563, %v384
        %v631 = vmul.f32 %v563, %v385
        %v632 = vmul.f32 %v567, %v383
        %v633 = vmul.f32 %v567, %v384
        %v634 = vmul.f32 %v567, %v385
        %v635 = vmul.f32 %v571, %v383
        %v636 = vmul.f32 %v571, %v384
        %v637 = vmul.f32 %v571, %v385
        %v638 = vmul.f32 %v575, %v383
        %v639 = vmul.f32 %v575, %v384
        %v640 = vmul.f32 %v575, %v385
        %v641 = vmul.f32 %v579, %v383
        %v642 = vmul.f32 %v579, %v384
        %v643 = vmul.f32 %v579, %v385
        %v646 = vcombine.high %v414, %v414
        %v648 = vunpack.c.l.s4 1966171168
        %v649 = vunpack.c.0.s8 %v648
        %v650 = vlaneseq
        %v651 = vshrl.u32 %v650, 7
        %v652 = vsub.s32 %v649, %v651
        %v653 = vrot.slane %v414, %v652
        %v655 = vunpack.c.l.s4 1966171168
        %v656 = vunpack.c.0.s8 %v655
        %v657 = vlaneseq
        %v658 = vshrl.u32 %v657, 7
        %v659 = vsub.s32 %v656, %v658
        %v660 = vrot.slane %v646, %v659
        %v661 = vcombine.high %v653, %v653
        %v662 = vcombine.high %v660, %v660
        %v664 = vunpack.c.l.s4 1966171168
        %v665 = vunpack.c.0.s8 %v664
        %v666 = vlaneseq
        %v667 = vshrl.u32 %v666, 7
        %v668 = vsub.s32 %v665, %v667
        %v669 = vrot.slane %v653, %v668
        %v671 = vunpack.c.l.s4 1966171168
        %v672 = vunpack.c.0.s8 %v671
        %v673 = vlaneseq
        %v674 = vshrl.u32 %v673, 7
        %v675 = vsub.s32 %v672, %v674
        %v676 = vrot.slane %v660, %v675
        %v678 = vunpack.c.l.s4 1966171168
        %v679 = vunpack.c.0.s8 %v678
        %v680 = vlaneseq
        %v681 = vshrl.u32 %v680, 7
        %v682 = vsub.s32 %v679, %v681
        %v683 = vrot.slane %v661, %v682
        %v685 = vunpack.c.l.s4 1966171168
        %v686 = vunpack.c.0.s8 %v685
        %v687 = vlaneseq
        %v688 = vshrl.u32 %v687, 7
        %v689 = vsub.s32 %v686, %v688
        %v690 = vrot.slane %v662, %v689
        %v691 = vcombine.high %v669, %v669
        %v692 = vcombine.high %v676, %v676
        %v693 = vcombine.high %v683, %v683
        %v694 = vcombine.high %v690, %v690
        %v695 = vcombine.high %v415, %v415
        %v697 = vunpack.c.l.s4 1966171168
        %v698 = vunpack.c.0.s8 %v697
        %v699 = vlaneseq
        %v700 = vshrl.u32 %v699, 7
        %v701 = vsub.s32 %v698, %v700
        %v702 = vrot.slane %v415, %v701
        %v704 = vunpack.c.l.s4 1966171168
        %v705 = vunpack.c.0.s8 %v704
        %v706 = vlaneseq
        %v707 = vshrl.u32 %v706, 7
        %v708 = vsub.s32 %v705, %v707
        %v709 = vrot.slane %v695, %v708
        %v710 = vcombine.high %v702, %v702
        %v711 = vcombine.high %v709, %v709
        %v713 = vunpack.c.l.s4 1966171168
        %v714 = vunpack.c.0.s8 %v713
        %v715 = vlaneseq
        %v716 = vshrl.u32 %v715, 7
        %v717 = vsub.s32 %v714, %v716
        %v718 = vrot.slane %v702, %v717
        %v720 = vunpack.c.l.s4 1966171168
        %v721 = vunpack.c.0.s8 %v720
        %v722 = vlaneseq
        %v723 = vshrl.u32 %v722, 7
        %v724 = vsub.s32 %v721, %v723
        %v725 = vrot.slane %v709, %v724
        %v727 = vunpack.c.l.s4 1966171168
        %v728 = vunpack.c.0.s8 %v727
        %v729 = vlaneseq
        %v730 = vshrl.u32 %v729, 7
        %v731 = vsub.s32 %v728, %v730
        %v732 = vrot.slane %v710, %v731
        %v734 = vunpack.c.l.s4 1966171168
        %v735 = vunpack.c.0.s8 %v734
        %v736 = vlaneseq
        %v737 = vshrl.u32 %v736, 7
        %v738 = vsub.s32 %v735, %v737
        %v739 = vrot.slane %v711, %v738
        %v740 = vcombine.high %v718, %v718
        %v741 = vcombine.high %v725, %v725
        %v742 = vcombine.high %v732, %v732
        %v743 = vcombine.high %v739, %v739
        %v744 = vlaneseq
        %v745 = vshrl.u32 %v744, 7
        %v746 = vsub.s32 0, %v745
        %v747 = vrot.slane %v669, %v746
        %v748 = vlaneseq
        %v749 = vshrl.u32 %v748, 7
        %v750 = vsub.s32 0, %v749
        %v751 = vrot.slane %v683, %v750
        %v752 = vlaneseq
        %v753 = vshrl.u32 %v752, 7
        %v754 = vsub.s32 0, %v753
        %v755 = vrot.slane %v691, %v754
        %v756 = vlaneseq
        %v757 = vshrl.u32 %v756, 7
        %v758 = vsub.s32 0, %v757
        %v759 = vrot.slane %v693, %v758
        %v760 = vlaneseq
        %v761 = vshrl.u32 %v760, 7
        %v762 = vsub.s32 0, %v761
        %v763 = vrot.slane %v676, %v762
        %v764 = vlaneseq
        %v765 = vshrl.u32 %v764, 7
        %v766 = vsub.s32 0, %v765
        %v767 = vrot.slane %v690, %v766
        %v768 = vlaneseq
        %v769 = vshrl.u32 %v768, 7
        %v770 = vsub.s32 0, %v769
        %v771 = vrot.slane %v692, %v770
        %v772 = vlaneseq
        %v773 = vshrl.u32 %v772, 7
        %v774 = vsub.s32 0, %v773
        %v775 = vrot.slane %v694, %v774
        %v776 = vlaneseq
        %v777 = vshrl.u32 %v776, 7
        %v778 = vsub.s32 0, %v777
        %v779 = vrot.slane %v718, %v778
        %v780 = vlaneseq
        %v781 = vshrl.u32 %v780, 7
        %v782 = vsub.s32 0, %v781
        %v783 = vrot.slane %v732, %v782
        %v784 = vlaneseq
        %v785 = vshrl.u32 %v784, 7
        %v786 = vsub.s32 0, %v785
        %v787 = vrot.slane %v740, %v786
        %v788 = vlaneseq
        %v789 = vshrl.u32 %v788, 7
        %v790 = vsub.s32 0, %v789
        %v791 = vrot.slane %v742, %v790
        %v792 = vlaneseq
        %v793 = vshrl.u32 %v792, 7
        %v794 = vsub.s32 0, %v793
        %v795 = vrot.slane %v725, %v794
        %v796 = vlaneseq
        %v797 = vshrl.u32 %v796, 7
        %v798 = vsub.s32 0, %v797
        %v799 = vrot.slane %v739, %v798
        %v800 = vlaneseq
        %v801 = vshrl.u32 %v800, 7
        %v802 = vsub.s32 0, %v801
        %v803 = vrot.slane %v741, %v802
        %v804 = vlaneseq
        %v805 = vshrl.u32 %v804, 7
        %v806 = vsub.s32 0, %v805
        %v807 = vrot.slane %v743, %v806
        %v824 = vsub.f32 %v596, %v747
        %v825 = vsub.f32 %v597, %v747
        %v826 = vsub.f32 %v598, %v747
        %v827 = vsub.f32 %v599, %v751
        %v828 = vsub.f32 %v600, %v751
        %v829 = vsub.f32 %v601, %v751
        %v830 = vsub.f32 %v602, %v755
        %v831 = vsub.f32 %v603, %v755
        %v832 = vsub.f32 %v604, %v755
        %v833 = vsub.f32 %v605, %v759
        %v834 = vsub.f32 %v606, %v759
        %v835 = vsub.f32 %v607, %v759
        %v836 = vsub.f32 %v608, %v763
        %v837 = vsub.f32 %v609, %v763
        %v838 = vsub.f32 %v610, %v763
        %v839 = vsub.f32 %v611, %v767
        %v840 = vsub.f32 %v612, %v767
        %v841 = vsub.f32 %v613, %v767
        %v842 = vsub.f32 %v614, %v771
        %v843 = vsub.f32 %v615, %v771
        %v844 = vsub.f32 %v616, %v771
        %v845 = vsub.f32 %v617, %v775
        %v846 = vsub.f32 %v618, %v775
        %v847 = vsub.f32 %v619, %v775
        %v848 = vsub.f32 %v620, %v779
        %v849 = vsub.f32 %v621, %v779
        %v850 = vsub.f32 %v622, %v779
        %v851 = vsub.f32 %v623, %v783
        %v852 = vsub.f32 %v624, %v783
        %v853 = vsub.f32 %v625, %v783
        %v854 = vsub.f32 %v626, %v787
        %v855 = vsub.f32 %v627, %v787
        %v856 = vsub.f32 %v628, %v787
        %v857 = vsub.f32 %v629, %v791
        %v858 = vsub.f32 %v630, %v791
        %v859 = vsub.f32 %v631, %v791
        %v860 = vsub.f32 %v632, %v795
        %v861 = vsub.f32 %v633, %v795
        %v862 = vsub.f32 %v634, %v795
        %v863 = vsub.f32 %v635, %v799
        %v864 = vsub.f32 %v636, %v799
        %v865 = vsub.f32 %v637, %v799
        %v866 = vsub.f32 %v638, %v803
        %v867 = vsub.f32 %v639, %v803
        %v868 = vsub.f32 %v640, %v803
        %v869 = vsub.f32 %v641, %v807
        %v870 = vsub.f32 %v642, %v807
        %v871 = vsub.f32 %v643, %v807
        %v872 = vmul.f32 %v824, 1.442695
        %v873 = vpow.pop %v872
        %v874 = vmul.f32 %v825, 1.442695
        %v875 = vpow.pop %v874
        %v876 = vmul.f32 %v826, 1.442695
        %v877 = vpow.pop %v876
        %v878 = vmul.f32 %v827, 1.442695
        %v879 = vpow.pop %v878
        %v880 = vmul.f32 %v828, 1.442695
        %v881 = vpow.pop %v880
        %v882 = vmul.f32 %v829, 1.442695
        %v883 = vpow.pop %v882
        %v884 = vmul.f32 %v830, 1.442695
        %v885 = vpow.pop %v884
        %v886 = vmul.f32 %v831, 1.442695
        %v887 = vpow.pop %v886
        %v888 = vmul.f32 %v832, 1.442695
        %v889 = vpow.pop %v888
        %v890 = vmul.f32 %v833, 1.442695
        %v891 = vpow.pop %v890
        %v892 = vmul.f32 %v834, 1.442695
        %v893 = vpow.pop %v892
        %v894 = vmul.f32 %v835, 1.442695
        %v895 = vpow.pop %v894
        %v896 = vmul.f32 %v836, 1.442695
        %v897 = vpow.pop %v896
        %v898 = vmul.f32 %v837, 1.442695
        %v899 = vpow.pop %v898
        %v900 = vmul.f32 %v838, 1.442695
        %v901 = vpow.pop %v900
        %v902 = vmul.f32 %v839, 1.442695
        %v903 = vpow.pop %v902
        %v904 = vmul.f32 %v840, 1.442695
        %v905 = vpow.pop %v904
        %v906 = vmul.f32 %v841, 1.442695
        %v907 = vpow.pop %v906
        %v908 = vmul.f32 %v842, 1.442695
        %v909 = vpow.pop %v908
        %v910 = vmul.f32 %v843, 1.442695
        %v911 = vpow.pop %v910
        %v912 = vmul.f32 %v844, 1.442695
        %v913 = vpow.pop %v912
        %v914 = vmul.f32 %v845, 1.442695
        %v915 = vpow.pop %v914
        %v916 = vmul.f32 %v846, 1.442695
        %v917 = vpow.pop %v916
        %v918 = vmul.f32 %v847, 1.442695
        %v919 = vpow.pop %v918
        %v920 = vmul.f32 %v848, 1.442695
        %v921 = vpow.pop %v920
        %v922 = vmul.f32 %v849, 1.442695
        %v923 = vpow.pop %v922
        %v924 = vmul.f32 %v850, 1.442695
        %v925 = vpow.pop %v924
        %v926 = vmul.f32 %v851, 1.442695
        %v927 = vpow.pop %v926
        %v928 = vmul.f32 %v852, 1.442695
        %v929 = vpow.pop %v928
        %v930 = vmul.f32 %v853, 1.442695
        %v931 = vpow.pop %v930
        %v932 = vmul.f32 %v854, 1.442695
        %v933 = vpow.pop %v932
        %v934 = vmul.f32 %v855, 1.442695
        %v935 = vpow.pop %v934
        %v936 = vmul.f32 %v856, 1.442695
        %v937 = vpow.pop %v936
        %v938 = vmul.f32 %v857, 1.442695
        %v939 = vpow.pop %v938
        %v940 = vmul.f32 %v858, 1.442695
        %v941 = vpow.pop %v940
        %v942 = vmul.f32 %v859, 1.442695
        %v943 = vpow.pop %v942
        %v944 = vmul.f32 %v860, 1.442695
        %v945 = vpow.pop %v944
        %v946 = vmul.f32 %v861, 1.442695
        %v947 = vpow.pop %v946
        %v948 = vmul.f32 %v862, 1.442695
        %v949 = vpow.pop %v948
        %v950 = vmul.f32 %v863, 1.442695
        %v951 = vpow.pop %v950
        %v952 = vmul.f32 %v864, 1.442695
        %v953 = vpow.pop %v952
        %v954 = vmul.f32 %v865, 1.442695
        %v955 = vpow.pop %v954
        %v956 = vmul.f32 %v866, 1.442695
        %v957 = vpow.pop %v956
        %v958 = vmul.f32 %v867, 1.442695
        %v959 = vpow.pop %v958
        %v960 = vmul.f32 %v868, 1.442695
        %v961 = vpow.pop %v960
        %v962 = vmul.f32 %v869, 1.442695
        %v963 = vpow.pop %v962
        %v964 = vmul.f32 %v870, 1.442695
        %v965 = vpow.pop %v964
        %v966 = vmul.f32 %v871, 1.442695
        %v967 = vpow.pop %v966
        %v968 = vmul.f32 %v873, %v391
        %v969 = vmul.f32 %v875, %v392
        %v970 = vmul.f32 %v877, %v393
        %v971 = vmul.f32 %v879, %v391
        %v972 = vmul.f32 %v881, %v392
        %v973 = vmul.f32 %v883, %v393
        %v974 = vmul.f32 %v885, %v391
        %v975 = vmul.f32 %v887, %v392
        %v976 = vmul.f32 %v889, %v393
        %v977 = vmul.f32 %v891, %v391
        %v978 = vmul.f32 %v893, %v392
        %v979 = vmul.f32 %v895, %v393
        %v980 = vmul.f32 %v897, %v391
        %v981 = vmul.f32 %v899, %v392
        %v982 = vmul.f32 %v901, %v393
        %v983 = vmul.f32 %v903, %v391
        %v984 = vmul.f32 %v905, %v392
        %v985 = vmul.f32 %v907, %v393
        %v986 = vmul.f32 %v909, %v391
        %v987 = vmul.f32 %v911, %v392
        %v988 = vmul.f32 %v913, %v393
        %v989 = vmul.f32 %v915, %v391
        %v990 = vmul.f32 %v917, %v392
        %v991 = vmul.f32 %v919, %v393
        %v992 = vmul.f32 %v921, %v391
        %v993 = vmul.f32 %v923, %v392
        %v994 = vmul.f32 %v925, %v393
        %v995 = vmul.f32 %v927, %v391
        %v996 = vmul.f32 %v929, %v392
        %v997 = vmul.f32 %v931, %v393
        %v998 = vmul.f32 %v933, %v391
        %v999 = vmul.f32 %v935, %v392
        %v1000 = vmul.f32 %v937, %v393
        %v1001 = vmul.f32 %v939, %v391
        %v1002 = vmul.f32 %v941, %v392
        %v1003 = vmul.f32 %v943, %v393
        %v1004 = vmul.f32 %v945, %v391
        %v1005 = vmul.f32 %v947, %v392
        %v1006 = vmul.f32 %v949, %v393
        %v1007 = vmul.f32 %v951, %v391
        %v1008 = vmul.f32 %v953, %v392
        %v1009 = vmul.f32 %v955, %v393
        %v1010 = vmul.f32 %v957, %v391
        %v1011 = vmul.f32 %v959, %v392
        %v1012 = vmul.f32 %v961, %v393
        %v1013 = vmul.f32 %v963, %v391
        %v1014 = vmul.f32 %v965, %v392
        %v1015 = vmul.f32 %v967, %v393
        %v1016 = vadd.f32 %v968, %v969
        %v1017 = vadd.f32 %v1016, %v970
        %v1018 = vrot.slane %v1017, 4
        %v1019 = vadd.f32 %v1017, %v1018
        %v1020 = vrot.slane %v1019, 2
        %v1021 = vadd.f32 %v1019, %v1020
        %v1022 = vrot.slane %v1021, 1
        %v1023 = vadd.f32 %v1021, %v1022
        %v1024 = vadd.f32 %v971, %v972
        %v1025 = vadd.f32 %v1024, %v973
        %v1026 = vrot.slane %v1025, 4
        %v1027 = vadd.f32 %v1025, %v1026
        %v1028 = vrot.slane %v1027, 2
        %v1029 = vadd.f32 %v1027, %v1028
        %v1030 = vrot.slane %v1029, 1
        %v1031 = vadd.f32 %v1029, %v1030
        %v1032 = vadd.f32 %v974, %v975
        %v1033 = vadd.f32 %v1032, %v976
        %v1034 = vrot.slane %v1033, 4
        %v1035 = vadd.f32 %v1033, %v1034
        %v1036 = vrot.slane %v1035, 2
        %v1037 = vadd.f32 %v1035, %v1036
        %v1038 = vrot.slane %v1037, 1
        %v1039 = vadd.f32 %v1037, %v1038
        %v1040 = vadd.f32 %v977, %v978
        %v1041 = vadd.f32 %v1040, %v979
        %v1042 = vrot.slane %v1041, 4
        %v1043 = vadd.f32 %v1041, %v1042
        %v1044 = vrot.slane %v1043, 2
        %v1045 = vadd.f32 %v1043, %v1044
        %v1046 = vrot.slane %v1045, 1
        %v1047 = vadd.f32 %v1045, %v1046
        %v1048 = vadd.f32 %v980, %v981
        %v1049 = vadd.f32 %v1048, %v982
        %v1050 = vrot.slane %v1049, 4
        %v1051 = vadd.f32 %v1049, %v1050
        %v1052 = vrot.slane %v1051, 2
        %v1053 = vadd.f32 %v1051, %v1052
        %v1054 = vrot.slane %v1053, 1
        %v1055 = vadd.f32 %v1053, %v1054
        %v1056 = vadd.f32 %v983, %v984
        %v1057 = vadd.f32 %v1056, %v985
        %v1058 = vrot.slane %v1057, 4
        %v1059 = vadd.f32 %v1057, %v1058
        %v1060 = vrot.slane %v1059, 2
        %v1061 = vadd.f32 %v1059, %v1060
        %v1062 = vrot.slane %v1061, 1
        %v1063 = vadd.f32 %v1061, %v1062
        %v1064 = vadd.f32 %v986, %v987
        %v1065 = vadd.f32 %v1064, %v988
        %v1066 = vrot.slane %v1065, 4
        %v1067 = vadd.f32 %v1065, %v1066
        %v1068 = vrot.slane %v1067, 2
        %v1069 = vadd.f32 %v1067, %v1068
        %v1070 = vrot.slane %v1069, 1
        %v1071 = vadd.f32 %v1069, %v1070
        %v1072 = vadd.f32 %v989, %v990
        %v1073 = vadd.f32 %v1072, %v991
        %v1074 = vrot.slane %v1073, 4
        %v1075 = vadd.f32 %v1073, %v1074
        %v1076 = vrot.slane %v1075, 2
        %v1077 = vadd.f32 %v1075, %v1076
        %v1078 = vrot.slane %v1077, 1
        %v1079 = vadd.f32 %v1077, %v1078
        %v1080 = vadd.f32 %v992, %v993
        %v1081 = vadd.f32 %v1080, %v994
        %v1082 = vrot.slane %v1081, 4
        %v1083 = vadd.f32 %v1081, %v1082
        %v1084 = vrot.slane %v1083, 2
        %v1085 = vadd.f32 %v1083, %v1084
        %v1086 = vrot.slane %v1085, 1
        %v1087 = vadd.f32 %v1085, %v1086
        %v1088 = vadd.f32 %v995, %v996
        %v1089 = vadd.f32 %v1088, %v997
        %v1090 = vrot.slane %v1089, 4
        %v1091 = vadd.f32 %v1089, %v1090
        %v1092 = vrot.slane %v1091, 2
        %v1093 = vadd.f32 %v1091, %v1092
        %v1094 = vrot.slane %v1093, 1
        %v1095 = vadd.f32 %v1093, %v1094
        %v1096 = vadd.f32 %v998, %v999
        %v1097 = vadd.f32 %v1096, %v1000
        %v1098 = vrot.slane %v1097, 4
        %v1099 = vadd.f32 %v1097, %v1098
        %v1100 = vrot.slane %v1099, 2
        %v1101 = vadd.f32 %v1099, %v1100
        %v1102 = vrot.slane %v1101, 1
        %v1103 = vadd.f32 %v1101, %v1102
        %v1104 = vadd.f32 %v1001, %v1002
        %v1105 = vadd.f32 %v1104, %v1003
        %v1106 = vrot.slane %v1105, 4
        %v1107 = vadd.f32 %v1105, %v1106
        %v1108 = vrot.slane %v1107, 2
        %v1109 = vadd.f32 %v1107, %v1108
        %v1110 = vrot.slane %v1109, 1
        %v1111 = vadd.f32 %v1109, %v1110
        %v1112 = vadd.f32 %v1004, %v1005
        %v1113 = vadd.f32 %v1112, %v1006
        %v1114 = vrot.slane %v1113, 4
        %v1115 = vadd.f32 %v1113, %v1114
        %v1116 = vrot.slane %v1115, 2
        %v1117 = vadd.f32 %v1115, %v1116
        %v1118 = vrot.slane %v1117, 1
        %v1119 = vadd.f32 %v1117, %v1118
        %v1120 = vadd.f32 %v1007, %v1008
        %v1121 = vadd.f32 %v1120, %v1009
        %v1122 = vrot.slane %v1121, 4
        %v1123 = vadd.f32 %v1121, %v1122
        %v1124 = vrot.slane %v1123, 2
        %v1125 = vadd.f32 %v1123, %v1124
        %v1126 = vrot.slane %v1125, 1
        %v1127 = vadd.f32 %v1125, %v1126
        %v1128 = vadd.f32 %v1010, %v1011
        %v1129 = vadd.f32 %v1128, %v1012
        %v1130 = vrot.slane %v1129, 4
        %v1131 = vadd.f32 %v1129, %v1130
        %v1132 = vrot.slane %v1131, 2
        %v1133 = vadd.f32 %v1131, %v1132
        %v1134 = vrot.slane %v1133, 1
        %v1135 = vadd.f32 %v1133, %v1134
        %v1136 = vadd.f32 %v1013, %v1014
        %v1137 = vadd.f32 %v1136, %v1015
        %v1138 = vrot.slane %v1137, 4
        %v1139 = vadd.f32 %v1137, %v1138
        %v1140 = vrot.slane %v1139, 2
        %v1141 = vadd.f32 %v1139, %v1140
        %v1142 = vrot.slane %v1141, 1
        %v1143 = vadd.f32 %v1141, %v1142
        %v1144 = vadd.f32 %v873, %v875
        %v1145 = vadd.f32 %v1144, %v877
        %v1146 = vrot.slane %v1145, 4
        %v1147 = vadd.f32 %v1145, %v1146
        %v1148 = vrot.slane %v1147, 2
        %v1149 = vadd.f32 %v1147, %v1148
        %v1150 = vrot.slane %v1149, 1
        %v1151 = vadd.f32 %v1149, %v1150
        %v1152 = vadd.f32 %v879, %v881
        %v1153 = vadd.f32 %v1152, %v883
        %v1154 = vrot.slane %v1153, 4
        %v1155 = vadd.f32 %v1153, %v1154
        %v1156 = vrot.slane %v1155, 2
        %v1157 = vadd.f32 %v1155, %v1156
        %v1158 = vrot.slane %v1157, 1
        %v1159 = vadd.f32 %v1157, %v1158
        %v1160 = vadd.f32 %v885, %v887
        %v1161 = vadd.f32 %v1160, %v889
        %v1162 = vrot.slane %v1161, 4
        %v1163 = vadd.f32 %v1161, %v1162
        %v1164 = vrot.slane %v1163, 2
        %v1165 = vadd.f32 %v1163, %v1164
        %v1166 = vrot.slane %v1165, 1
        %v1167 = vadd.f32 %v1165, %v1166
        %v1168 = vadd.f32 %v891, %v893
        %v1169 = vadd.f32 %v1168, %v895
        %v1170 = vrot.slane %v1169, 4
        %v1171 = vadd.f32 %v1169, %v1170
        %v1172 = vrot.slane %v1171, 2
        %v1173 = vadd.f32 %v1171, %v1172
        %v1174 = vrot.slane %v1173, 1
        %v1175 = vadd.f32 %v1173, %v1174
        %v1176 = vadd.f32 %v897, %v899
        %v1177 = vadd.f32 %v1176, %v901
        %v1178 = vrot.slane %v1177, 4
        %v1179 = vadd.f32 %v1177, %v1178
        %v1180 = vrot.slane %v1179, 2
        %v1181 = vadd.f32 %v1179, %v1180
        %v1182 = vrot.slane %v1181, 1
        %v1183 = vadd.f32 %v1181, %v1182
        %v1184 = vadd.f32 %v903, %v905
        %v1185 = vadd.f32 %v1184, %v907
        %v1186 = vrot.slane %v1185, 4
        %v1187 = vadd.f32 %v1185, %v1186
        %v1188 = vrot.slane %v1187, 2
        %v1189 = vadd.f32 %v1187, %v1188
        %v1190 = vrot.slane %v1189, 1
        %v1191 = vadd.f32 %v1189, %v1190
        %v1192 = vadd.f32 %v909, %v911
        %v1193 = vadd.f32 %v1192, %v913
        %v1194 = vrot.slane %v1193, 4
        %v1195 = vadd.f32 %v1193, %v1194
        %v1196 = vrot.slane %v1195, 2
        %v1197 = vadd.f32 %v1195, %v1196
        %v1198 = vrot.slane %v1197, 1
        %v1199 = vadd.f32 %v1197, %v1198
        %v1200 = vadd.f32 %v915, %v917
        %v1201 = vadd.f32 %v1200, %v919
        %v1202 = vrot.slane %v1201, 4
        %v1203 = vadd.f32 %v1201, %v1202
        %v1204 = vrot.slane %v1203, 2
        %v1205 = vadd.f32 %v1203, %v1204
        %v1206 = vrot.slane %v1205, 1
        %v1207 = vadd.f32 %v1205, %v1206
        %v1208 = vadd.f32 %v921, %v923
        %v1209 = vadd.f32 %v1208, %v925
        %v1210 = vrot.slane %v1209, 4
        %v1211 = vadd.f32 %v1209, %v1210
        %v1212 = vrot.slane %v1211, 2
        %v1213 = vadd.f32 %v1211, %v1212
        %v1214 = vrot.slane %v1213, 1
        %v1215 = vadd.f32 %v1213, %v1214
        %v1216 = vadd.f32 %v927, %v929
        %v1217 = vadd.f32 %v1216, %v931
        %v1218 = vrot.slane %v1217, 4
        %v1219 = vadd.f32 %v1217, %v1218
        %v1220 = vrot.slane %v1219, 2
        %v1221 = vadd.f32 %v1219, %v1220
        %v1222 = vrot.slane %v1221, 1
        %v1223 = vadd.f32 %v1221, %v1222
        %v1224 = vadd.f32 %v933, %v935
        %v1225 = vadd.f32 %v1224, %v937
        %v1226 = vrot.slane %v1225, 4
        %v1227 = vadd.f32 %v1225, %v1226
        %v1228 = vrot.slane %v1227, 2
        %v1229 = vadd.f32 %v1227, %v1228
        %v1230 = vrot.slane %v1229, 1
        %v1231 = vadd.f32 %v1229, %v1230
        %v1232 = vadd.f32 %v939, %v941
        %v1233 = vadd.f32 %v1232, %v943
        %v1234 = vrot.slane %v1233, 4
        %v1235 = vadd.f32 %v1233, %v1234
        %v1236 = vrot.slane %v1235, 2
        %v1237 = vadd.f32 %v1235, %v1236
        %v1238 = vrot.slane %v1237, 1
        %v1239 = vadd.f32 %v1237, %v1238
        %v1240 = vadd.f32 %v945, %v947
        %v1241 = vadd.f32 %v1240, %v949
        %v1242 = vrot.slane %v1241, 4
        %v1243 = vadd.f32 %v1241, %v1242
        %v1244 = vrot.slane %v1243, 2
        %v1245 = vadd.f32 %v1243, %v1244
        %v1246 = vrot.slane %v1245, 1
        %v1247 = vadd.f32 %v1245, %v1246
        %v1248 = vadd.f32 %v951, %v953
        %v1249 = vadd.f32 %v1248, %v955
        %v1250 = vrot.slane %v1249, 4
        %v1251 = vadd.f32 %v1249, %v1250
        %v1252 = vrot.slane %v1251, 2
        %v1253 = vadd.f32 %v1251, %v1252
        %v1254 = vrot.slane %v1253, 1
        %v1255 = vadd.f32 %v1253, %v1254
        %v1256 = vadd.f32 %v957, %v959
        %v1257 = vadd.f32 %v1256, %v961
        %v1258 = vrot.slane %v1257, 4
        %v1259 = vadd.f32 %v1257, %v1258
        %v1260 = vrot.slane %v1259, 2
        %v1261 = vadd.f32 %v1259, %v1260
        %v1262 = vrot.slane %v1261, 1
        %v1263 = vadd.f32 %v1261, %v1262
        %v1264 = vadd.f32 %v963, %v965
        %v1265 = vadd.f32 %v1264, %v967
        %v1266 = vrot.slane %v1265, 4
        %v1267 = vadd.f32 %v1265, %v1266
        %v1268 = vrot.slane %v1267, 2
        %v1269 = vadd.f32 %v1267, %v1268
        %v1270 = vrot.slane %v1269, 1
        %v1271 = vadd.f32 %v1269, %v1270
        %v1272 = vrcp.pop %v1151
        %v1273 = vrcp.pop %v1159
        %v1274 = vrcp.pop %v1167
        %v1275 = vrcp.pop %v1175
        %v1276 = vrcp.pop %v1183
        %v1277 = vrcp.pop %v1191
        %v1278 = vrcp.pop %v1199
        %v1279 = vrcp.pop %v1207
        %v1280 = vrcp.pop %v1215
        %v1281 = vrcp.pop %v1223
        %v1282 = vrcp.pop %v1231
        %v1283 = vrcp.pop %v1239
        %v1284 = vrcp.pop %v1247
        %v1285 = vrcp.pop %v1255
        %v1286 = vrcp.pop %v1263
        %v1287 = vrcp.pop %v1271
        %v1288 = vmul.f32 %v1023, %v1272
        %v1289 = vmul.f32 %v1031, %v1273
        %v1290 = vmul.f32 %v1039, %v1274
        %v1291 = vmul.f32 %v1047, %v1275
        %v1292 = vmul.f32 %v1055, %v1276
        %v1293 = vmul.f32 %v1063, %v1277
        %v1294 = vmul.f32 %v1071, %v1278
        %v1295 = vmul.f32 %v1079, %v1279
        %v1296 = vmul.f32 %v1087, %v1280
        %v1297 = vmul.f32 %v1095, %v1281
        %v1298 = vmul.f32 %v1103, %v1282
        %v1299 = vmul.f32 %v1111, %v1283
        %v1300 = vmul.f32 %v1119, %v1284
        %v1301 = vmul.f32 %v1127, %v1285
        %v1302 = vmul.f32 %v1135, %v1286
        %v1303 = vmul.f32 %v1143, %v1287
        %v1304 = vstv %s370
        %v1305 = vmul.f32 %v1304, %v1288
        %v1306 = vmul.f32 %v1304, %v1289
        %v1307 = vmul.f32 %v1304, %v1290
        %v1308 = vmul.f32 %v1304, %v1291
        %v1309 = vmul.f32 %v1304, %v1292
        %v1310 = vmul.f32 %v1304, %v1293
        %v1311 = vmul.f32 %v1304, %v1294
        %v1312 = vmul.f32 %v1304, %v1295
        %v1313 = vmul.f32 %v1304, %v1296
        %v1314 = vmul.f32 %v1304, %v1297
        %v1315 = vmul.f32 %v1304, %v1298
        %v1316 = vmul.f32 %v1304, %v1299
        %v1317 = vmul.f32 %v1304, %v1300
        %v1318 = vmul.f32 %v1304, %v1301
        %v1319 = vmul.f32 %v1304, %v1302
        %v1320 = vmul.f32 %v1304, %v1303
        %v1321 = vstv %s371
        %v1322 = vadd.f32 %v1305, %v1321
        %v1323 = vadd.f32 %v1306, %v1321
        %v1324 = vadd.f32 %v1307, %v1321
        %v1325 = vadd.f32 %v1308, %v1321
        %v1326 = vadd.f32 %v1309, %v1321
        %v1327 = vadd.f32 %v1310, %v1321
        %v1328 = vadd.f32 %v1311, %v1321
        %v1329 = vadd.f32 %v1312, %v1321
        %v1330 = vadd.f32 %v1313, %v1321
        %v1331 = vadd.f32 %v1314, %v1321
        %v1332 = vadd.f32 %v1315, %v1321
        %v1333 = vadd.f32 %v1316, %v1321
        %v1334 = vadd.f32 %v1317, %v1321
        %v1335 = vadd.f32 %v1318, %v1321
        %v1336 = vadd.f32 %v1319, %v1321
        %v1337 = vadd.f32 %v1320, %v1321
        %1338 = vst [vmem:[#allocation2] sm:$0xff] %v361
        %vm1355 = vcmask 1041409
        %v1356 = vsel %vm1355, %v1323, %v1322
        %vm1357 = vcmask 1042434
        %v1358 = vsel %vm1357, %v1324, %v1356
        %vm1359 = vcmask 1043459
        %v1360 = vsel %vm1359, %v1325, %v1358
        %vm1361 = vcmask 1044484
        %v1362 = vsel %vm1361, %v1326, %v1360
        %vm1363 = vcmask 1045509
        %v1364 = vsel %vm1363, %v1327, %v1362
        %vm1365 = vcmask 1046534
        %v1366 = vsel %vm1365, %v1328, %v1364
        %vm1367 = vcmask 1047559
        %v1368 = vsel %vm1367, %v1329, %v1366
        %v1369 = vsel %vm1355, %v1331, %v1330
        %v1370 = vsel %vm1357, %v1332, %v1369
        %v1371 = vsel %vm1359, %v1333, %v1370
        %v1372 = vsel %vm1361, %v1334, %v1371
        %v1373 = vsel %vm1363, %v1335, %v1372
        %v1374 = vsel %vm1365, %v1336, %v1373
        %v1375 = vsel %vm1367, %v1337, %v1374
        %v1378 = vmul.f32 %v362, %v1368
        %v1379 = vmul.f32 %v363, %v1375
        %1380 = vst [vmem:[#allocation2 + $0x8] sm:$0xff] %v1378
        %1381 = vst [vmem:[#allocation2 + $0x10] sm:$0xff] %v1379
        %v1382 = vld [vmem:[#allocation2] sm:$0xff]
        %v1383 = vld [vmem:[#allocation2 + $0x8] sm:$0xff]
        %v1384 = vld [vmem:[#allocation2 + $0x10] sm:$0xff]
        %v1385 = vpack.c.bf16 %v1383, %v1382
        %v1386 = vpack.c.bf16 %v1384, %v1384
        %v1387 = vld [vmem:[%s2] sm:$0xf]
        %v1388 = vld [vmem:[%s2 + $0x4] sm:$0xf]
        %v1389 = vld [vmem:[%s2 + $0x8] sm:$0xf]
        %v1390 = vld [vmem:[%s2 + $0xc] sm:$0xf]
        %v1391 = vld [vmem:[%s2 + $0x10] sm:$0xf]
        %v1392 = vld [vmem:[%s2 + $0x14] sm:$0xf]
        %v1393 = vld [vmem:[%s2 + $0x18] sm:$0xf]
        %v1394 = vld [vmem:[%s2 + $0x1c] sm:$0xf]
        %v1395 = vld [vmem:[%s2 + $0x20] sm:$0xf]
        %v1396 = vld [vmem:[%s2 + $0x24] sm:$0xf]
        %v1397 = vld [vmem:[%s2 + $0x28] sm:$0xf]
        %v1398 = vld [vmem:[%s2 + $0x2c] sm:$0xf]
        %v1399 = vld [vmem:[%s2 + $0x30] sm:$0xf]
        %v1400 = vld [vmem:[%s2 + $0x34] sm:$0xf]
        %v1401 = vld [vmem:[%s2 + $0x38] sm:$0xf]
        %v1402 = vld [vmem:[%s2 + $0x3c] sm:$0xf]
        %v1403 = vld [vmem:[%s2 + $0x40] sm:$0xf]
        %v1404 = vld [vmem:[%s2 + $0x44] sm:$0xf]
        %v1405 = vld [vmem:[%s2 + $0x48] sm:$0xf]
        %v1406 = vld [vmem:[%s2 + $0x4c] sm:$0xf]
        %v1407 = vld [vmem:[%s2 + $0x50] sm:$0xf]
        %v1408 = vld [vmem:[%s2 + $0x54] sm:$0xf]
        %v1409 = vld [vmem:[%s2 + $0x58] sm:$0xf]
        %v1410 = vld [vmem:[%s2 + $0x5c] sm:$0xf]
        %v1411 = vld [vmem:[%s2 + $0x60] sm:$0xf]
        %v1412 = vld [vmem:[%s2 + $0x64] sm:$0xf]
        %v1413 = vld [vmem:[%s2 + $0x68] sm:$0xf]
        %v1414 = vld [vmem:[%s2 + $0x6c] sm:$0xf]
        %v1415 = vld [vmem:[%s2 + $0x70] sm:$0xf]
        %v1416 = vld [vmem:[%s2 + $0x74] sm:$0xf]
        %v1417 = vld [vmem:[%s2 + $0x78] sm:$0xf]
        %v1418 = vld [vmem:[%s2 + $0x7c] sm:$0xf]
        %v1419 = vld [vmem:[%s3] sm:$0xff]
        %v1420 = vld [vmem:[%s3 + $0x8] sm:$0xff]
        %v1421 = vld [vmem:[%s3 + $0x10] sm:$0xff]
        %v1422 = vld [vmem:[%s3 + $0x18] sm:$0xff]
        %v1423 = vld [vmem:[%s3 + $0x20] sm:$0xff]
        %v1424 = vld [vmem:[%s3 + $0x28] sm:$0xff]
        %v1425 = vld [vmem:[%s3 + $0x30] sm:$0xff]
        %v1426 = vld [vmem:[%s3 + $0x38] sm:$0xff]
        %v1427 = vld [vmem:[%s3 + $0x40] sm:$0xff]
        %v1428 = vld [vmem:[%s3 + $0x48] sm:$0xff]
        %v1429 = vld [vmem:[%s3 + $0x50] sm:$0xff]
        %v1430 = vld [vmem:[%s3 + $0x58] sm:$0xff]
        %v1431 = vld [vmem:[%s3 + $0x60] sm:$0xff]
        %v1432 = vld [vmem:[%s3 + $0x68] sm:$0xff]
        %v1433 = vld [vmem:[%s3 + $0x70] sm:$0xff]
        %v1434 = vld [vmem:[%s3 + $0x78] sm:$0xff]
        %v1435 = vld [vmem:[%s3 + $0x80] sm:$0xff]
        %v1436 = vld [vmem:[%s3 + $0x88] sm:$0xff]
        %v1437 = vld [vmem:[%s3 + $0x90] sm:$0xff]
        %v1438 = vld [vmem:[%s3 + $0x98] sm:$0xff]
        %v1439 = vld [vmem:[%s3 + $0xa0] sm:$0xff]
        %v1440 = vld [vmem:[%s3 + $0xa8] sm:$0xff]
        %v1441 = vld [vmem:[%s3 + $0xb0] sm:$0xff]
        %v1442 = vld [vmem:[%s3 + $0xb8] sm:$0xff]
        %v1443 = vld [vmem:[%s3 + $0xc0] sm:$0xff]
        %v1444 = vld [vmem:[%s3 + $0xc8] sm:$0xff]
        %v1445 = vld [vmem:[%s3 + $0xd0] sm:$0xff]
        %v1446 = vld [vmem:[%s3 + $0xd8] sm:$0xff]
        %v1447 = vld [vmem:[%s3 + $0xe0] sm:$0xff]
        %v1448 = vld [vmem:[%s3 + $0xe8] sm:$0xff]
        %v1449 = vld [vmem:[%s3 + $0xf0] sm:$0xff]
        %v1450 = vld [vmem:[%s3 + $0xf8] sm:$0xff]
        %1452 = vset.pattern.permute.xlu0 0
        %1453 = vperm.xlu0 %1452, %v1419
        %v1454 = vpop.permute.xlu0 %1453
        %1457 = vset.pattern.permute.xlu0 0
        %1458 = vperm.xlu0 %1457, %v1420
        %v1459 = vpop.permute.xlu0 %1458
        %1462 = vset.pattern.permute.xlu0 0
        %1463 = vperm.xlu0 %1462, %v1421
        %v1464 = vpop.permute.xlu0 %1463
        %1467 = vset.pattern.permute.xlu0 0
        %1468 = vperm.xlu0 %1467, %v1422
        %v1469 = vpop.permute.xlu0 %1468
        %1472 = vset.pattern.permute.xlu0 0
        %1473 = vperm.xlu0 %1472, %v1423
        %v1474 = vpop.permute.xlu0 %1473
        %1477 = vset.pattern.permute.xlu0 0
        %1478 = vperm.xlu0 %1477, %v1424
        %v1479 = vpop.permute.xlu0 %1478
        %1482 = vset.pattern.permute.xlu0 0
        %1483 = vperm.xlu0 %1482, %v1425
        %v1484 = vpop.permute.xlu0 %1483
        %1487 = vset.pattern.permute.xlu0 0
        %1488 = vperm.xlu0 %1487, %v1426
        %v1489 = vpop.permute.xlu0 %1488
        %1492 = vset.pattern.permute.xlu0 0
        %1493 = vperm.xlu0 %1492, %v1427
        %v1494 = vpop.permute.xlu0 %1493
        %1497 = vset.pattern.permute.xlu0 0
        %1498 = vperm.xlu0 %1497, %v1428
        %v1499 = vpop.permute.xlu0 %1498
        %1502 = vset.pattern.permute.xlu0 0
        %1503 = vperm.xlu0 %1502, %v1429
        %v1504 = vpop.permute.xlu0 %1503
        %1507 = vset.pattern.permute.xlu0 0
        %1508 = vperm.xlu0 %1507, %v1430
        %v1509 = vpop.permute.xlu0 %1508
        %1512 = vset.pattern.permute.xlu0 0
        %1513 = vperm.xlu0 %1512, %v1431
        %v1514 = vpop.permute.xlu0 %1513
        %1517 = vset.pattern.permute.xlu0 0
        %1518 = vperm.xlu0 %1517, %v1432
        %v1519 = vpop.permute.xlu0 %1518
        %1522 = vset.pattern.permute.xlu0 0
        %1523 = vperm.xlu0 %1522, %v1433
        %v1524 = vpop.permute.xlu0 %1523
        %1527 = vset.pattern.permute.xlu0 0
        %1528 = vperm.xlu0 %1527, %v1434
        %v1529 = vpop.permute.xlu0 %1528
        %1532 = vset.pattern.permute.xlu0 0
        %1533 = vperm.xlu0 %1532, %v1435
        %v1534 = vpop.permute.xlu0 %1533
        %1537 = vset.pattern.permute.xlu0 0
        %1538 = vperm.xlu0 %1537, %v1436
        %v1539 = vpop.permute.xlu0 %1538
        %1542 = vset.pattern.permute.xlu0 0
        %1543 = vperm.xlu0 %1542, %v1437
        %v1544 = vpop.permute.xlu0 %1543
        %1547 = vset.pattern.permute.xlu0 0
        %1548 = vperm.xlu0 %1547, %v1438
        %v1549 = vpop.permute.xlu0 %1548
        %1552 = vset.pattern.permute.xlu0 0
        %1553 = vperm.xlu0 %1552, %v1439
        %v1554 = vpop.permute.xlu0 %1553
        %1557 = vset.pattern.permute.xlu0 0
        %1558 = vperm.xlu0 %1557, %v1440
        %v1559 = vpop.permute.xlu0 %1558
        %1562 = vset.pattern.permute.xlu0 0
        %1563 = vperm.xlu0 %1562, %v1441
        %v1564 = vpop.permute.xlu0 %1563
        %1567 = vset.pattern.permute.xlu0 0
        %1568 = vperm.xlu0 %1567, %v1442
        %v1569 = vpop.permute.xlu0 %1568
        %1572 = vset.pattern.permute.xlu0 0
        %1573 = vperm.xlu0 %1572, %v1443
        %v1574 = vpop.permute.xlu0 %1573
        %1577 = vset.pattern.permute.xlu0 0
        %1578 = vperm.xlu0 %1577, %v1444
        %v1579 = vpop.permute.xlu0 %1578
        %1582 = vset.pattern.permute.xlu0 0
        %1583 = vperm.xlu0 %1582, %v1445
        %v1584 = vpop.permute.xlu0 %1583
        %1587 = vset.pattern.permute.xlu0 0
        %1588 = vperm.xlu0 %1587, %v1446
        %v1589 = vpop.permute.xlu0 %1588
        %1592 = vset.pattern.permute.xlu0 0
        %1593 = vperm.xlu0 %1592, %v1447
        %v1594 = vpop.permute.xlu0 %1593
        %1597 = vset.pattern.permute.xlu0 0
        %1598 = vperm.xlu0 %1597, %v1448
        %v1599 = vpop.permute.xlu0 %1598
        %1602 = vset.pattern.permute.xlu0 0
        %1603 = vperm.xlu0 %1602, %v1449
        %v1604 = vpop.permute.xlu0 %1603
        %1607 = vset.pattern.permute.xlu0 0
        %1608 = vperm.xlu0 %1607, %v1450
        %v1609 = vpop.permute.xlu0 %1608
        %v1643 = vunpack.c.l.b16 %v1387
        %v1644 = vunpack.c.l.b16 %v1388
        %v1645 = vunpack.c.l.b16 %v1389
        %v1646 = vunpack.c.l.b16 %v1390
        %v1647 = vunpack.c.l.b16 %v1391
        %v1648 = vunpack.c.l.b16 %v1392
        %v1649 = vunpack.c.l.b16 %v1393
        %v1650 = vunpack.c.l.b16 %v1394
        %v1651 = vunpack.c.l.b16 %v1395
        %v1652 = vunpack.c.l.b16 %v1396
        %v1653 = vunpack.c.l.b16 %v1397
        %v1654 = vunpack.c.l.b16 %v1398
        %v1655 = vunpack.c.l.b16 %v1399
        %v1656 = vunpack.c.l.b16 %v1400
        %v1657 = vunpack.c.l.b16 %v1401
        %v1658 = vunpack.c.l.b16 %v1402
        %v1659 = vunpack.c.l.b16 %v1403
        %v1660 = vunpack.c.l.b16 %v1404
        %v1661 = vunpack.c.l.b16 %v1405
        %v1662 = vunpack.c.l.b16 %v1406
        %v1663 = vunpack.c.l.b16 %v1407
        %v1664 = vunpack.c.l.b16 %v1408
        %v1665 = vunpack.c.l.b16 %v1409
        %v1666 = vunpack.c.l.b16 %v1410
        %v1667 = vunpack.c.l.b16 %v1411
        %v1668 = vunpack.c.l.b16 %v1412
        %v1669 = vunpack.c.l.b16 %v1413
        %v1670 = vunpack.c.l.b16 %v1414
        %v1671 = vunpack.c.l.b16 %v1415
        %v1672 = vunpack.c.l.b16 %v1416
        %v1673 = vunpack.c.l.b16 %v1417
        %v1674 = vunpack.c.l.b16 %v1418
        %v1675 = vpack.c.b16 %v1644, %v1643
        %v1676 = vpack.c.b16 %v1646, %v1645
        %v1677 = vpack.c.b16 %v1648, %v1647
        %v1678 = vpack.c.b16 %v1650, %v1649
        %v1679 = vpack.c.b16 %v1652, %v1651
        %v1680 = vpack.c.b16 %v1654, %v1653
        %v1681 = vpack.c.b16 %v1656, %v1655
        %v1682 = vpack.c.b16 %v1658, %v1657
        %v1683 = vpack.c.b16 %v1660, %v1659
        %v1684 = vpack.c.b16 %v1662, %v1661
        %v1685 = vpack.c.b16 %v1664, %v1663
        %v1686 = vpack.c.b16 %v1666, %v1665
        %v1687 = vpack.c.b16 %v1668, %v1667
        %v1688 = vpack.c.b16 %v1670, %v1669
        %v1689 = vpack.c.b16 %v1672, %v1671
        %v1690 = vpack.c.b16 %v1674, %v1673
        %vm1691 = vcmask 195584
        %v1693 = vsel %vm1691, %v1675, 0
        %v1696 = vsel %vm1691, %v1676, 0
        %v1699 = vsel %vm1691, %v1677, 0
        %v1702 = vsel %vm1691, %v1678, 0
        %v1705 = vsel %vm1691, %v1679, 0
        %v1708 = vsel %vm1691, %v1680, 0
        %v1711 = vsel %vm1691, %v1681, 0
        %v1714 = vsel %vm1691, %v1682, 0
        %v1717 = vsel %vm1691, %v1683, 0
        %v1720 = vsel %vm1691, %v1684, 0
        %v1723 = vsel %vm1691, %v1685, 0
        %v1726 = vsel %vm1691, %v1686, 0
        %v1729 = vsel %vm1691, %v1687, 0
        %v1732 = vsel %vm1691, %v1688, 0
        %v1735 = vsel %vm1691, %v1689, 0
        %v1738 = vsel %vm1691, %v1690, 0
        %vm1740 = vcmask 1043456
        %v1742 = vsel %vm1740, %v1386, 0
        %1744 = vmatprep.subr.bf16.mxu0 0
        %1745 = vmatpush1.bf16.msra.mxu0 %v1385
        %1746 = vmatprep.subr.bf16.mxu0 0
        %1747 = vmatpush1.bf16.msra.mxu0 %v1742
        %1748 = vmatprep.subr.bf16.mxu0 0
        %1749 = vmatpush1.bf16.msra.mxu0 0
        %1750 = vmatprep.subr.bf16.mxu0 0
        %1751 = vmatpush1.bf16.msra.mxu0 0
        %1752 = vmatprep.subr.bf16.mxu0 0
        %1753 = vmatpush1.bf16.msra.mxu0 0
        %1754 = vmatprep.subr.bf16.mxu0 0
        %1755 = vmatpush1.bf16.msra.mxu0 0
        %1756 = vmatprep.subr.bf16.mxu0 0
        %1757 = vmatpush1.bf16.msra.mxu0 0
        %1758 = vmatprep.subr.bf16.mxu0 0
        %1759 = vmatpush1.bf16.msra.mxu0 0
        %1760 = vmatprep.subr.bf16.mxu0 0
        %1761 = vmatpush1.bf16.msra.mxu0 0
        %1762 = vmatprep.subr.bf16.mxu0 0
        %1763 = vmatpush1.bf16.msra.mxu0 0
        %1764 = vmatprep.subr.bf16.mxu0 0
        %1765 = vmatpush1.bf16.msra.mxu0 0
        %1766 = vmatprep.subr.bf16.mxu0 0
        %1767 = vmatpush1.bf16.msra.mxu0 0
        %1768 = vmatprep.subr.bf16.mxu0 0
        %1769 = vmatpush1.bf16.msra.mxu0 0
        %1770 = vmatprep.subr.bf16.mxu0 0
        %1771 = vmatpush1.bf16.msra.mxu0 0
        %1772 = vmatprep.subr.bf16.mxu0 0
        %1773 = vmatpush1.bf16.msra.mxu0 0
        %1774 = vmatprep.subr.bf16.mxu0 0
        %1775 = vmatpush1.bf16.msra.mxu0 0
        %1776 = vmatprep.mubr.bf16.mxu0 0
        %1777 = vmatmul.mubr.bf16.gmra.mrb[0].mxu0 %v1693
        %v1778 = vpop.f32.mrb[0].mxu0
        %v1779 = vadd.f32 %v1454, %v1778
        %v1780 = vpop.f32.mrb[0].mxu0
        %v1781 = vpop.f32.mrb[0].mxu0
        %v1782 = vadd.f32 %v1459, %v1781
        %v1783 = vpop.f32.mrb[0].mxu0
        %1784 = vmatprep.mubr.bf16.mxu0 0
        %1785 = vmatmul.mubr.bf16.gmra.mrb[0].mxu0 %v1696
        %v1786 = vpop.f32.mrb[0].mxu0
        %v1787 = vadd.f32 %v1464, %v1786
        %v1788 = vpop.f32.mrb[0].mxu0
        %v1789 = vpop.f32.mrb[0].mxu0
        %v1790 = vadd.f32 %v1469, %v1789
        %v1791 = vpop.f32.mrb[0].mxu0
        %1792 = vmatprep.mubr.bf16.mxu0 0
        %1793 = vmatmul.mubr.bf16.gmra.mrb[0].mxu0 %v1699
        %v1794 = vpop.f32.mrb[0].mxu0
        %v1795 = vadd.f32 %v1474, %v1794
        %v1796 = vpop.f32.mrb[0].mxu0
        %v1797 = vpop.f32.mrb[0].mxu0
        %v1798 = vadd.f32 %v1479, %v1797
        %v1799 = vpop.f32.mrb[0].mxu0
        %1800 = vmatprep.mubr.bf16.mxu0 0
        %1801 = vmatmul.mubr.bf16.gmra.mrb[0].mxu0 %v1702
        %v1802 = vpop.f32.mrb[0].mxu0
        %v1803 = vadd.f32 %v1484, %v1802
        %v1804 = vpop.f32.mrb[0].mxu0
        %v1805 = vpop.f32.mrb[0].mxu0
        %v1806 = vadd.f32 %v1489, %v1805
        %v1807 = vpop.f32.mrb[0].mxu0
        %1808 = vmatprep.mubr.bf16.mxu0 0
        %1809 = vmatmul.mubr.bf16.gmra.mrb[0].mxu0 %v1705
        %v1810 = vpop.f32.mrb[0].mxu0
        %v1811 = vadd.f32 %v1494, %v1810
        %v1812 = vpop.f32.mrb[0].mxu0
        %v1813 = vpop.f32.mrb[0].mxu0
        %v1814 = vadd.f32 %v1499, %v1813
        %v1815 = vpop.f32.mrb[0].mxu0
        %1816 = vmatprep.mubr.bf16.mxu0 0
        %1817 = vmatmul.mubr.bf16.gmra.mrb[0].mxu0 %v1708
        %v1818 = vpop.f32.mrb[0].mxu0
        %v1819 = vadd.f32 %v1504, %v1818
        %v1820 = vpop.f32.mrb[0].mxu0
        %v1821 = vpop.f32.mrb[0].mxu0
        %v1822 = vadd.f32 %v1509, %v1821
        %v1823 = vpop.f32.mrb[0].mxu0
        %1824 = vmatprep.mubr.bf16.mxu0 0
        %1825 = vmatmul.mubr.bf16.gmra.mrb[0].mxu0 %v1711
        %v1826 = vpop.f32.mrb[0].mxu0
        %v1827 = vadd.f32 %v1514, %v1826
        %v1828 = vpop.f32.mrb[0].mxu0
        %v1829 = vpop.f32.mrb[0].mxu0
        %v1830 = vadd.f32 %v1519, %v1829
        %v1831 = vpop.f32.mrb[0].mxu0
        %1832 = vmatprep.mubr.bf16.mxu0 0
        %1833 = vmatmul.mubr.bf16.gmra.mrb[0].mxu0 %v1714
        %v1834 = vpop.f32.mrb[0].mxu0
        %v1835 = vadd.f32 %v1524, %v1834
        %v1836 = vpop.f32.mrb[0].mxu0
        %v1837 = vpop.f32.mrb[0].mxu0
        %v1838 = vadd.f32 %v1529, %v1837
        %v1839 = vpop.f32.mrb[0].mxu0
        %1840 = vmatprep.mubr.bf16.mxu0 0
        %1841 = vmatmul.mubr.bf16.gmra.mrb[0].mxu0 %v1717
        %v1842 = vpop.f32.mrb[0].mxu0
        %v1843 = vadd.f32 %v1534, %v1842
        %v1844 = vpop.f32.mrb[0].mxu0
        %v1845 = vpop.f32.mrb[0].mxu0
        %v1846 = vadd.f32 %v1539, %v1845
        %v1847 = vpop.f32.mrb[0].mxu0
        %1848 = vmatprep.mubr.bf16.mxu0 0
        %1849 = vmatmul.mubr.bf16.gmra.mrb[0].mxu0 %v1720
        %v1850 = vpop.f32.mrb[0].mxu0
        %v1851 = vadd.f32 %v1544, %v1850
        %v1852 = vpop.f32.mrb[0].mxu0
        %v1853 = vpop.f32.mrb[0].mxu0
        %v1854 = vadd.f32 %v1549, %v1853
        %v1855 = vpop.f32.mrb[0].mxu0
        %1856 = vmatprep.mubr.bf16.mxu0 0
        %1857 = vmatmul.mubr.bf16.gmra.mrb[0].mxu0 %v1723
        %v1858 = vpop.f32.mrb[0].mxu0
        %v1859 = vadd.f32 %v1554, %v1858
        %v1860 = vpop.f32.mrb[0].mxu0
        %v1861 = vpop.f32.mrb[0].mxu0
        %v1862 = vadd.f32 %v1559, %v1861
        %v1863 = vpop.f32.mrb[0].mxu0
        %1864 = vmatprep.mubr.bf16.mxu0 0
        %1865 = vmatmul.mubr.bf16.gmra.mrb[0].mxu0 %v1726
        %v1866 = vpop.f32.mrb[0].mxu0
        %v1867 = vadd.f32 %v1564, %v1866
        %v1868 = vpop.f32.mrb[0].mxu0
        %v1869 = vpop.f32.mrb[0].mxu0
        %v1870 = vadd.f32 %v1569, %v1869
        %v1871 = vpop.f32.mrb[0].mxu0
        %1872 = vmatprep.mubr.bf16.mxu0 0
        %1873 = vmatmul.mubr.bf16.gmra.mrb[0].mxu0 %v1729
        %v1874 = vpop.f32.mrb[0].mxu0
        %v1875 = vadd.f32 %v1574, %v1874
        %v1876 = vpop.f32.mrb[0].mxu0
        %v1877 = vpop.f32.mrb[0].mxu0
        %v1878 = vadd.f32 %v1579, %v1877
        %v1879 = vpop.f32.mrb[0].mxu0
        %1880 = vmatprep.mubr.bf16.mxu0 0
        %1881 = vmatmul.mubr.bf16.gmra.mrb[0].mxu0 %v1732
        %v1882 = vpop.f32.mrb[0].mxu0
        %v1883 = vadd.f32 %v1584, %v1882
        %v1884 = vpop.f32.mrb[0].mxu0
        %v1885 = vpop.f32.mrb[0].mxu0
        %v1886 = vadd.f32 %v1589, %v1885
        %v1887 = vpop.f32.mrb[0].mxu0
        %1888 = vmatprep.mubr.bf16.mxu0 0
        %1889 = vmatmul.mubr.bf16.gmra.mrb[0].mxu0 %v1735
        %v1890 = vpop.f32.mrb[0].mxu0
        %v1891 = vadd.f32 %v1594, %v1890
        %v1892 = vpop.f32.mrb[0].mxu0
        %v1893 = vpop.f32.mrb[0].mxu0
        %v1894 = vadd.f32 %v1599, %v1893
        %v1895 = vpop.f32.mrb[0].mxu0
        %1896 = vmatprep.mubr.bf16.mxu0 0
        %1897 = vmatmul.mubr.bf16.gmra.mrb[0].mxu0 %v1738
        %v1898 = vpop.f32.mrb[0].mxu0
        %v1899 = vadd.f32 %v1604, %v1898
        %v1900 = vpop.f32.mrb[0].mxu0
        %v1901 = vpop.f32.mrb[0].mxu0
        %v1902 = vadd.f32 %v1609, %v1901
        %v1903 = vpop.f32.mrb[0].mxu0
        %1904 = vdwg.mxu0
        %v1905 = vmax.f32 %v1779, 0.0
        %v1906 = vmax.f32 %v1782, 0.0
        %v1907 = vmax.f32 %v1787, 0.0
        %v1908 = vmax.f32 %v1790, 0.0
        %v1909 = vmax.f32 %v1795, 0.0
        %v1910 = vmax.f32 %v1798, 0.0
        %v1911 = vmax.f32 %v1803, 0.0
        %v1912 = vmax.f32 %v1806, 0.0
        %v1913 = vmax.f32 %v1811, 0.0
        %v1914 = vmax.f32 %v1814, 0.0
        %v1915 = vmax.f32 %v1819, 0.0
        %v1916 = vmax.f32 %v1822, 0.0
        %v1917 = vmax.f32 %v1827, 0.0
        %v1918 = vmax.f32 %v1830, 0.0
        %v1919 = vmax.f32 %v1835, 0.0
        %v1920 = vmax.f32 %v1838, 0.0
        %v1921 = vmax.f32 %v1843, 0.0
        %v1922 = vmax.f32 %v1846, 0.0
        %v1923 = vmax.f32 %v1851, 0.0
        %v1924 = vmax.f32 %v1854, 0.0
        %v1925 = vmax.f32 %v1859, 0.0
        %v1926 = vmax.f32 %v1862, 0.0
        %v1927 = vmax.f32 %v1867, 0.0
        %v1928 = vmax.f32 %v1870, 0.0
        %v1929 = vmax.f32 %v1875, 0.0
        %v1930 = vmax.f32 %v1878, 0.0
        %v1931 = vmax.f32 %v1883, 0.0
        %v1932 = vmax.f32 %v1886, 0.0
        %v1933 = vmax.f32 %v1891, 0.0
        %v1934 = vmax.f32 %v1894, 0.0
        %v1935 = vmax.f32 %v1899, 0.0
        %v1936 = vmax.f32 %v1902, 0.0
        %v1937 = vld [vmem:[%s4] sm:$0xff]
        %v1938 = vld [vmem:[%s4 + $0x8] sm:$0xff]
        %v1939 = vld [vmem:[%s4 + $0x10] sm:$0xff]
        %v1940 = vld [vmem:[%s4 + $0x18] sm:$0xff]
        %v1941 = vld [vmem:[%s4 + $0x20] sm:$0xff]
        %v1942 = vld [vmem:[%s4 + $0x28] sm:$0xff]
        %v1943 = vld [vmem:[%s4 + $0x30] sm:$0xff]
        %v1944 = vld [vmem:[%s4 + $0x38] sm:$0xff]
        %v1945 = vld [vmem:[%s4 + $0x40] sm:$0xff]
        %v1946 = vld [vmem:[%s4 + $0x48] sm:$0xff]
        %v1947 = vld [vmem:[%s4 + $0x50] sm:$0xff]
        %v1948 = vld [vmem:[%s4 + $0x58] sm:$0xff]
        %v1949 = vld [vmem:[%s4 + $0x60] sm:$0xff]
        %v1950 = vld [vmem:[%s4 + $0x68] sm:$0xff]
        %v1951 = vld [vmem:[%s4 + $0x70] sm:$0xff]
        %v1952 = vld [vmem:[%s4 + $0x78] sm:$0xff]
        %v1953 = vld [vmem:[%s4 + $0x80] sm:$0xff]
        %v1954 = vld [vmem:[%s4 + $0x88] sm:$0xff]
        %v1955 = vld [vmem:[%s4 + $0x90] sm:$0xff]
        %v1956 = vld [vmem:[%s4 + $0x98] sm:$0xff]
        %v1957 = vld [vmem:[%s4 + $0xa0] sm:$0xff]
        %v1958 = vld [vmem:[%s4 + $0xa8] sm:$0xff]
        %v1959 = vld [vmem:[%s4 + $0xb0] sm:$0xff]
        %v1960 = vld [vmem:[%s4 + $0xb8] sm:$0xff]
        %v1961 = vld [vmem:[%s4 + $0xc0] sm:$0xff]
        %v1962 = vld [vmem:[%s4 + $0xc8] sm:$0xff]
        %v1963 = vld [vmem:[%s4 + $0xd0] sm:$0xff]
        %v1964 = vld [vmem:[%s4 + $0xd8] sm:$0xff]
        %v1965 = vld [vmem:[%s4 + $0xe0] sm:$0xff]
        %v1966 = vld [vmem:[%s4 + $0xe8] sm:$0xff]
        %v1967 = vld [vmem:[%s4 + $0xf0] sm:$0xff]
        %v1968 = vld [vmem:[%s4 + $0xf8] sm:$0xff]
        %v1969 = vpack.c.bf16 %v1906, %v1905
        %v1970 = vpack.c.bf16 %v1908, %v1907
        %v1971 = vpack.c.bf16 %v1910, %v1909
        %v1972 = vpack.c.bf16 %v1912, %v1911
        %v1973 = vpack.c.bf16 %v1914, %v1913
        %v1974 = vpack.c.bf16 %v1916, %v1915
        %v1975 = vpack.c.bf16 %v1918, %v1917
        %v1976 = vpack.c.bf16 %v1920, %v1919
        %v1977 = vpack.c.bf16 %v1922, %v1921
        %v1978 = vpack.c.bf16 %v1924, %v1923
        %v1979 = vpack.c.bf16 %v1926, %v1925
        %v1980 = vpack.c.bf16 %v1928, %v1927
        %v1981 = vpack.c.bf16 %v1930, %v1929
        %v1982 = vpack.c.bf16 %v1932, %v1931
        %v1983 = vpack.c.bf16 %v1934, %v1933
        %v1984 = vpack.c.bf16 %v1936, %v1935
        %v1985 = vld [vmem:[%s5] sm:$0xff]
        %v1986 = vld [vmem:[%s5 + $0x8] sm:$0xff]
        %v1987 = vld [vmem:[%s5 + $0x10] sm:$0xff]
        %v1988 = vld [vmem:[%s5 + $0x18] sm:$0xff]
        %v1989 = vld [vmem:[%s5 + $0x20] sm:$0xff]
        %v1990 = vld [vmem:[%s5 + $0x28] sm:$0xff]
        %v1991 = vld [vmem:[%s5 + $0x30] sm:$0xff]
        %v1992 = vld [vmem:[%s5 + $0x38] sm:$0xff]
        %v1993 = vld [vmem:[%s5 + $0x40] sm:$0xff]
        %v1994 = vld [vmem:[%s5 + $0x48] sm:$0xff]
        %v1995 = vld [vmem:[%s5 + $0x50] sm:$0xff]
        %v1996 = vld [vmem:[%s5 + $0x58] sm:$0xff]
        %v1997 = vld [vmem:[%s5 + $0x60] sm:$0xff]
        %v1998 = vld [vmem:[%s5 + $0x68] sm:$0xff]
        %v1999 = vld [vmem:[%s5 + $0x70] sm:$0xff]
        %v2000 = vld [vmem:[%s5 + $0x78] sm:$0xff]
        %v2001 = vld [vmem:[%s5 + $0x80] sm:$0xff]
        %v2002 = vld [vmem:[%s5 + $0x88] sm:$0xff]
        %v2003 = vld [vmem:[%s5 + $0x90] sm:$0xff]
        %v2004 = vld [vmem:[%s5 + $0x98] sm:$0xff]
        %v2005 = vld [vmem:[%s5 + $0xa0] sm:$0xff]
        %v2006 = vld [vmem:[%s5 + $0xa8] sm:$0xff]
        %v2007 = vld [vmem:[%s5 + $0xb0] sm:$0xff]
        %v2008 = vld [vmem:[%s5 + $0xb8] sm:$0xff]
        %v2009 = vld [vmem:[%s5 + $0xc0] sm:$0xff]
        %v2010 = vld [vmem:[%s5 + $0xc8] sm:$0xff]
        %v2011 = vld [vmem:[%s5 + $0xd0] sm:$0xff]
        %v2012 = vld [vmem:[%s5 + $0xd8] sm:$0xff]
        %v2013 = vld [vmem:[%s5 + $0xe0] sm:$0xff]
        %v2014 = vld [vmem:[%s5 + $0xe8] sm:$0xff]
        %v2015 = vld [vmem:[%s5 + $0xf0] sm:$0xff]
        %v2016 = vld [vmem:[%s5 + $0xf8] sm:$0xff]
        %2018 = vset.pattern.permute.xlu0 0
        %2019 = vperm.xlu0 %2018, %v1985
        %v2020 = vpop.permute.xlu0 %2019
        %2023 = vset.pattern.permute.xlu0 0
        %2024 = vperm.xlu0 %2023, %v1986
        %v2025 = vpop.permute.xlu0 %2024
        %2028 = vset.pattern.permute.xlu0 0
        %2029 = vperm.xlu0 %2028, %v1987
        %v2030 = vpop.permute.xlu0 %2029
        %2033 = vset.pattern.permute.xlu0 0
        %2034 = vperm.xlu0 %2033, %v1988
        %v2035 = vpop.permute.xlu0 %2034
        %2038 = vset.pattern.permute.xlu0 0
        %2039 = vperm.xlu0 %2038, %v1989
        %v2040 = vpop.permute.xlu0 %2039
        %2043 = vset.pattern.permute.xlu0 0
        %2044 = vperm.xlu0 %2043, %v1990
        %v2045 = vpop.permute.xlu0 %2044
        %2048 = vset.pattern.permute.xlu0 0
        %2049 = vperm.xlu0 %2048, %v1991
        %v2050 = vpop.permute.xlu0 %2049
        %2053 = vset.pattern.permute.xlu0 0
        %2054 = vperm.xlu0 %2053, %v1992
        %v2055 = vpop.permute.xlu0 %2054
        %2058 = vset.pattern.permute.xlu0 0
        %2059 = vperm.xlu0 %2058, %v1993
        %v2060 = vpop.permute.xlu0 %2059
        %2063 = vset.pattern.permute.xlu0 0
        %2064 = vperm.xlu0 %2063, %v1994
        %v2065 = vpop.permute.xlu0 %2064
        %2068 = vset.pattern.permute.xlu0 0
        %2069 = vperm.xlu0 %2068, %v1995
        %v2070 = vpop.permute.xlu0 %2069
        %2073 = vset.pattern.permute.xlu0 0
        %2074 = vperm.xlu0 %2073, %v1996
        %v2075 = vpop.permute.xlu0 %2074
        %2078 = vset.pattern.permute.xlu0 0
        %2079 = vperm.xlu0 %2078, %v1997
        %v2080 = vpop.permute.xlu0 %2079
        %2083 = vset.pattern.permute.xlu0 0
        %2084 = vperm.xlu0 %2083, %v1998
        %v2085 = vpop.permute.xlu0 %2084
        %2088 = vset.pattern.permute.xlu0 0
        %2089 = vperm.xlu0 %2088, %v1999
        %v2090 = vpop.permute.xlu0 %2089
        %2093 = vset.pattern.permute.xlu0 0
        %2094 = vperm.xlu0 %2093, %v2000
        %v2095 = vpop.permute.xlu0 %2094
        %2098 = vset.pattern.permute.xlu0 0
        %2099 = vperm.xlu0 %2098, %v2001
        %v2100 = vpop.permute.xlu0 %2099
        %2103 = vset.pattern.permute.xlu0 0
        %2104 = vperm.xlu0 %2103, %v2002
        %v2105 = vpop.permute.xlu0 %2104
        %2108 = vset.pattern.permute.xlu0 0
        %2109 = vperm.xlu0 %2108, %v2003
        %v2110 = vpop.permute.xlu0 %2109
        %2113 = vset.pattern.permute.xlu0 0
        %2114 = vperm.xlu0 %2113, %v2004
        %v2115 = vpop.permute.xlu0 %2114
        %2118 = vset.pattern.permute.xlu0 0
        %2119 = vperm.xlu0 %2118, %v2005
        %v2120 = vpop.permute.xlu0 %2119
        %2123 = vset.pattern.permute.xlu0 0
        %2124 = vperm.xlu0 %2123, %v2006
        %v2125 = vpop.permute.xlu0 %2124
        %2128 = vset.pattern.permute.xlu0 0
        %2129 = vperm.xlu0 %2128, %v2007
        %v2130 = vpop.permute.xlu0 %2129
        %2133 = vset.pattern.permute.xlu0 0
        %2134 = vperm.xlu0 %2133, %v2008
        %v2135 = vpop.permute.xlu0 %2134
        %2138 = vset.pattern.permute.xlu0 0
        %2139 = vperm.xlu0 %2138, %v2009
        %v2140 = vpop.permute.xlu0 %2139
        %2143 = vset.pattern.permute.xlu0 0
        %2144 = vperm.xlu0 %2143, %v2010
        %v2145 = vpop.permute.xlu0 %2144
        %2148 = vset.pattern.permute.xlu0 0
        %2149 = vperm.xlu0 %2148, %v2011
        %v2150 = vpop.permute.xlu0 %2149
        %2153 = vset.pattern.permute.xlu0 0
        %2154 = vperm.xlu0 %2153, %v2012
        %v2155 = vpop.permute.xlu0 %2154
        %2158 = vset.pattern.permute.xlu0 0
        %2159 = vperm.xlu0 %2158, %v2013
        %v2160 = vpop.permute.xlu0 %2159
        %2163 = vset.pattern.permute.xlu0 0
        %2164 = vperm.xlu0 %2163, %v2014
        %v2165 = vpop.permute.xlu0 %2164
        %2168 = vset.pattern.permute.xlu0 0
        %2169 = vperm.xlu0 %2168, %v2015
        %v2170 = vpop.permute.xlu0 %2169
        %2173 = vset.pattern.permute.xlu0 0
        %2174 = vperm.xlu0 %2173, %v2016
        %v2175 = vpop.permute.xlu0 %2174
        %v2209 = vunpack.c.l.b16 %v1937
        %v2210 = vunpack.c.h.b16 %v1937
        %v2211 = vunpack.c.l.b16 %v1938
        %v2212 = vunpack.c.h.b16 %v1938
        %v2213 = vunpack.c.l.b16 %v1939
        %v2214 = vunpack.c.h.b16 %v1939
        %v2215 = vunpack.c.l.b16 %v1940
        %v2216 = vunpack.c.h.b16 %v1940
        %v2217 = vunpack.c.l.b16 %v1941
        %v2218 = vunpack.c.h.b16 %v1941
        %v2219 = vunpack.c.l.b16 %v1942
        %v2220 = vunpack.c.h.b16 %v1942
        %v2221 = vunpack.c.l.b16 %v1943
        %v2222 = vunpack.c.h.b16 %v1943
        %v2223 = vunpack.c.l.b16 %v1944
        %v2224 = vunpack.c.h.b16 %v1944
        %v2225 = vunpack.c.l.b16 %v1945
        %v2226 = vunpack.c.h.b16 %v1945
        %v2227 = vunpack.c.l.b16 %v1946
        %v2228 = vunpack.c.h.b16 %v1946
        %v2229 = vunpack.c.l.b16 %v1947
        %v2230 = vunpack.c.h.b16 %v1947
        %v2231 = vunpack.c.l.b16 %v1948
        %v2232 = vunpack.c.h.b16 %v1948
        %v2233 = vunpack.c.l.b16 %v1949
        %v2234 = vunpack.c.h.b16 %v1949
        %v2235 = vunpack.c.l.b16 %v1950
        %v2236 = vunpack.c.h.b16 %v1950
        %v2237 = vunpack.c.l.b16 %v1951
        %v2238 = vunpack.c.h.b16 %v1951
        %v2239 = vunpack.c.l.b16 %v1952
        %v2240 = vunpack.c.h.b16 %v1952
        %v2241 = vunpack.c.l.b16 %v1953
        %v2242 = vunpack.c.h.b16 %v1953
        %v2243 = vunpack.c.l.b16 %v1954
        %v2244 = vunpack.c.h.b16 %v1954
        %v2245 = vunpack.c.l.b16 %v1955
        %v2246 = vunpack.c.h.b16 %v1955
        %v2247 = vunpack.c.l.b16 %v1956
        %v2248 = vunpack.c.h.b16 %v1956
        %v2249 = vunpack.c.l.b16 %v1957
        %v2250 = vunpack.c.h.b16 %v1957
        %v2251 = vunpack.c.l.b16 %v1958
        %v2252 = vunpack.c.h.b16 %v1958
        %v2253 = vunpack.c.l.b16 %v1959
        %v2254 = vunpack.c.h.b16 %v1959
        %v2255 = vunpack.c.l.b16 %v1960
        %v2256 = vunpack.c.h.b16 %v1960
        %v2257 = vunpack.c.l.b16 %v1961
        %v2258 = vunpack.c.h.b16 %v1961
        %v2259 = vunpack.c.l.b16 %v1962
        %v2260 = vunpack.c.h.b16 %v1962
        %v2261 = vunpack.c.l.b16 %v1963
        %v2262 = vunpack.c.h.b16 %v1963
        %v2263 = vunpack.c.l.b16 %v1964
        %v2264 = vunpack.c.h.b16 %v1964
        %v2265 = vunpack.c.l.b16 %v1965
        %v2266 = vunpack.c.h.b16 %v1965
        %v2267 = vunpack.c.l.b16 %v1966
        %v2268 = vunpack.c.h.b16 %v1966
        %v2269 = vunpack.c.l.b16 %v1967
        %v2270 = vunpack.c.h.b16 %v1967
        %v2271 = vunpack.c.l.b16 %v1968
        %v2272 = vunpack.c.h.b16 %v1968
        %v2273 = vpack.c.b16 %v2211, %v2209
        %v2274 = vpack.c.b16 %v2212, %v2210
        %v2275 = vpack.c.b16 %v2215, %v2213
        %v2276 = vpack.c.b16 %v2216, %v2214
        %v2277 = vpack.c.b16 %v2219, %v2217
        %v2278 = vpack.c.b16 %v2220, %v2218
        %v2279 = vpack.c.b16 %v2223, %v2221
        %v2280 = vpack.c.b16 %v2224, %v2222
        %v2281 = vpack.c.b16 %v2227, %v2225
        %v2282 = vpack.c.b16 %v2228, %v2226
        %v2283 = vpack.c.b16 %v2231, %v2229
        %v2284 = vpack.c.b16 %v2232, %v2230
        %v2285 = vpack.c.b16 %v2235, %v2233
        %v2286 = vpack.c.b16 %v2236, %v2234
        %v2287 = vpack.c.b16 %v2239, %v2237
        %v2288 = vpack.c.b16 %v2240, %v2238
        %v2289 = vpack.c.b16 %v2243, %v2241
        %v2290 = vpack.c.b16 %v2244, %v2242
        %v2291 = vpack.c.b16 %v2247, %v2245
        %v2292 = vpack.c.b16 %v2248, %v2246
        %v2293 = vpack.c.b16 %v2251, %v2249
        %v2294 = vpack.c.b16 %v2252, %v2250
        %v2295 = vpack.c.b16 %v2255, %v2253
        %v2296 = vpack.c.b16 %v2256, %v2254
        %v2297 = vpack.c.b16 %v2259, %v2257
        %v2298 = vpack.c.b16 %v2260, %v2258
        %v2299 = vpack.c.b16 %v2263, %v2261
        %v2300 = vpack.c.b16 %v2264, %v2262
        %v2301 = vpack.c.b16 %v2267, %v2265
        %v2302 = vpack.c.b16 %v2268, %v2266
        %v2303 = vpack.c.b16 %v2271, %v2269
        %v2304 = vpack.c.b16 %v2272, %v2270
        %2337 = vmatprep.subr.bf16.mxu0 0
        %2338 = vmatpush1.bf16.msra.mxu0 %v1969
        %2339 = vmatprep.subr.bf16.mxu0 0
        %2340 = vmatpush1.bf16.msra.mxu0 %v1970
        %2341 = vmatprep.subr.bf16.mxu0 0
        %2342 = vmatpush1.bf16.msra.mxu0 %v1971
        %2343 = vmatprep.subr.bf16.mxu0 0
        %2344 = vmatpush1.bf16.msra.mxu0 %v1972
        %2345 = vmatprep.subr.bf16.mxu0 0
        %2346 = vmatpush1.bf16.msra.mxu0 %v1973
        %2347 = vmatprep.subr.bf16.mxu0 0
        %2348 = vmatpush1.bf16.msra.mxu0 %v1974
        %2349 = vmatprep.subr.bf16.mxu0 0
        %2350 = vmatpush1.bf16.msra.mxu0 %v1975
        %2351 = vmatprep.subr.bf16.mxu0 0
        %2352 = vmatpush1.bf16.msra.mxu0 %v1976
        %2353 = vmatprep.subr.bf16.mxu0 0
        %2354 = vmatpush1.bf16.msra.mxu0 %v1977
        %2355 = vmatprep.subr.bf16.mxu0 0
        %2356 = vmatpush1.bf16.msra.mxu0 %v1978
        %2357 = vmatprep.subr.bf16.mxu0 0
        %2358 = vmatpush1.bf16.msra.mxu0 %v1979
        %2359 = vmatprep.subr.bf16.mxu0 0
        %2360 = vmatpush1.bf16.msra.mxu0 %v1980
        %2361 = vmatprep.subr.bf16.mxu0 0
        %2362 = vmatpush1.bf16.msra.mxu0 %v1981
        %2363 = vmatprep.subr.bf16.mxu0 0
        %2364 = vmatpush1.bf16.msra.mxu0 %v1982
        %2365 = vmatprep.subr.bf16.mxu0 0
        %2366 = vmatpush1.bf16.msra.mxu0 %v1983
        %2367 = vmatprep.subr.bf16.mxu0 0
        %2368 = vmatpush1.bf16.msra.mxu0 %v1984
        %2369 = vmatprep.mubr.bf16.mxu0 %v2274
        %2370 = vmatmul.mubr.bf16.gmra.mrb[0].mxu0 %v2273
        %v2371 = vpop.f32.mrb[0].mxu0
        %v2372 = vadd.f32 %v2020, %v2371
        %v2373 = vpop.f32.mrb[0].mxu0
        %v2374 = vpop.f32.mrb[0].mxu0
        %v2375 = vadd.f32 %v2025, %v2374
        %v2376 = vpop.f32.mrb[0].mxu0
        %2377 = vmatprep.mubr.bf16.mxu0 %v2276
        %2378 = vmatmul.mubr.bf16.gmra.mrb[0].mxu0 %v2275
        %v2379 = vpop.f32.mrb[0].mxu0
        %v2380 = vadd.f32 %v2030, %v2379
        %v2381 = vpop.f32.mrb[0].mxu0
        %v2382 = vpop.f32.mrb[0].mxu0
        %v2383 = vadd.f32 %v2035, %v2382
        %v2384 = vpop.f32.mrb[0].mxu0
        %2385 = vmatprep.mubr.bf16.mxu0 %v2278
        %2386 = vmatmul.mubr.bf16.gmra.mrb[0].mxu0 %v2277
        %v2387 = vpop.f32.mrb[0].mxu0
        %v2388 = vadd.f32 %v2040, %v2387
        %v2389 = vpop.f32.mrb[0].mxu0
        %v2390 = vpop.f32.mrb[0].mxu0
        %v2391 = vadd.f32 %v2045, %v2390
        %v2392 = vpop.f32.mrb[0].mxu0
        %2393 = vmatprep.mubr.bf16.mxu0 %v2280
        %2394 = vmatmul.mubr.bf16.gmra.mrb[0].mxu0 %v2279
        %v2395 = vpop.f32.mrb[0].mxu0
        %v2396 = vadd.f32 %v2050, %v2395
        %v2397 = vpop.f32.mrb[0].mxu0
        %v2398 = vpop.f32.mrb[0].mxu0
        %v2399 = vadd.f32 %v2055, %v2398
        %v2400 = vpop.f32.mrb[0].mxu0
        %2401 = vmatprep.mubr.bf16.mxu0 %v2282
        %2402 = vmatmul.mubr.bf16.gmra.mrb[0].mxu0 %v2281
        %v2403 = vpop.f32.mrb[0].mxu0
        %v2404 = vadd.f32 %v2060, %v2403
        %v2405 = vpop.f32.mrb[0].mxu0
        %v2406 = vpop.f32.mrb[0].mxu0
        %v2407 = vadd.f32 %v2065, %v2406
        %v2408 = vpop.f32.mrb[0].mxu0
        %2409 = vmatprep.mubr.bf16.mxu0 %v2284
        %2410 = vmatmul.mubr.bf16.gmra.mrb[0].mxu0 %v2283
        %v2411 = vpop.f32.mrb[0].mxu0
        %v2412 = vadd.f32 %v2070, %v2411
        %v2413 = vpop.f32.mrb[0].mxu0
        %v2414 = vpop.f32.mrb[0].mxu0
        %v2415 = vadd.f32 %v2075, %v2414
        %v2416 = vpop.f32.mrb[0].mxu0
        %2417 = vmatprep.mubr.bf16.mxu0 %v2286
        %2418 = vmatmul.mubr.bf16.gmra.mrb[0].mxu0 %v2285
        %v2419 = vpop.f32.mrb[0].mxu0
        %v2420 = vadd.f32 %v2080, %v2419
        %v2421 = vpop.f32.mrb[0].mxu0
        %v2422 = vpop.f32.mrb[0].mxu0
        %v2423 = vadd.f32 %v2085, %v2422
        %v2424 = vpop.f32.mrb[0].mxu0
        %2425 = vmatprep.mubr.bf16.mxu0 %v2288
        %2426 = vmatmul.mubr.bf16.gmra.mrb[0].mxu0 %v2287
        %v2427 = vpop.f32.mrb[0].mxu0
        %v2428 = vadd.f32 %v2090, %v2427
        %v2429 = vpop.f32.mrb[0].mxu0
        %v2430 = vpop.f32.mrb[0].mxu0
        %v2431 = vadd.f32 %v2095, %v2430
        %v2432 = vpop.f32.mrb[0].mxu0
        %2433 = vmatprep.mubr.bf16.mxu0 %v2290
        %2434 = vmatmul.mubr.bf16.gmra.mrb[0].mxu0 %v2289
        %v2435 = vpop.f32.mrb[0].mxu0
        %v2436 = vadd.f32 %v2100, %v2435
        %v2437 = vpop.f32.mrb[0].mxu0
        %v2438 = vpop.f32.mrb[0].mxu0
        %v2439 = vadd.f32 %v2105, %v2438
        %v2440 = vpop.f32.mrb[0].mxu0
        %2441 = vmatprep.mubr.bf16.mxu0 %v2292
        %2442 = vmatmul.mubr.bf16.gmra.mrb[0].mxu0 %v2291
        %v2443 = vpop.f32.mrb[0].mxu0
        %v2444 = vadd.f32 %v2110, %v2443
        %v2445 = vpop.f32.mrb[0].mxu0
        %v2446 = vpop.f32.mrb[0].mxu0
        %v2447 = vadd.f32 %v2115, %v2446
        %v2448 = vpop.f32.mrb[0].mxu0
        %2449 = vmatprep.mubr.bf16.mxu0 %v2294
        %2450 = vmatmul.mubr.bf16.gmra.mrb[0].mxu0 %v2293
        %v2451 = vpop.f32.mrb[0].mxu0
        %v2452 = vadd.f32 %v2120, %v2451
        %v2453 = vpop.f32.mrb[0].mxu0
        %v2454 = vpop.f32.mrb[0].mxu0
        %v2455 = vadd.f32 %v2125, %v2454
        %v2456 = vpop.f32.mrb[0].mxu0
        %2457 = vmatprep.mubr.bf16.mxu0 %v2296
        %2458 = vmatmul.mubr.bf16.gmra.mrb[0].mxu0 %v2295
        %v2459 = vpop.f32.mrb[0].mxu0
        %v2460 = vadd.f32 %v2130, %v2459
        %v2461 = vpop.f32.mrb[0].mxu0
        %v2462 = vpop.f32.mrb[0].mxu0
        %v2463 = vadd.f32 %v2135, %v2462
        %v2464 = vpop.f32.mrb[0].mxu0
        %2465 = vmatprep.mubr.bf16.mxu0 %v2298
        %2466 = vmatmul.mubr.bf16.gmra.mrb[0].mxu0 %v2297
        %v2467 = vpop.f32.mrb[0].mxu0
        %v2468 = vadd.f32 %v2140, %v2467
        %v2469 = vpop.f32.mrb[0].mxu0
        %v2470 = vpop.f32.mrb[0].mxu0
        %v2471 = vadd.f32 %v2145, %v2470
        %v2472 = vpop.f32.mrb[0].mxu0
        %2473 = vmatprep.mubr.bf16.mxu0 %v2300
        %2474 = vmatmul.mubr.bf16.gmra.mrb[0].mxu0 %v2299
        %v2475 = vpop.f32.mrb[0].mxu0
        %v2476 = vadd.f32 %v2150, %v2475
        %v2477 = vpop.f32.mrb[0].mxu0
        %v2478 = vpop.f32.mrb[0].mxu0
        %v2479 = vadd.f32 %v2155, %v2478
        %v2480 = vpop.f32.mrb[0].mxu0
        %2481 = vmatprep.mubr.bf16.mxu0 %v2302
        %2482 = vmatmul.mubr.bf16.gmra.mrb[0].mxu0 %v2301
        %v2483 = vpop.f32.mrb[0].mxu0
        %v2484 = vadd.f32 %v2160, %v2483
        %v2485 = vpop.f32.mrb[0].mxu0
        %v2486 = vpop.f32.mrb[0].mxu0
        %v2487 = vadd.f32 %v2165, %v2486
        %v2488 = vpop.f32.mrb[0].mxu0
        %2489 = vmatprep.mubr.bf16.mxu0 %v2304
        %2490 = vmatmul.mubr.bf16.gmra.mrb[0].mxu0 %v2303
        %v2491 = vpop.f32.mrb[0].mxu0
        %v2492 = vadd.f32 %v2170, %v2491
        %v2493 = vpop.f32.mrb[0].mxu0
        %v2494 = vpop.f32.mrb[0].mxu0
        %v2495 = vadd.f32 %v2175, %v2494
        %v2496 = vpop.f32.mrb[0].mxu0
        %2497 = vdwg.mxu0
        %v2498 = vmax.f32 %v2372, 0.0
        %v2499 = vmax.f32 %v2375, 0.0
        %v2500 = vmax.f32 %v2380, 0.0
        %v2501 = vmax.f32 %v2383, 0.0
        %v2502 = vmax.f32 %v2388, 0.0
        %v2503 = vmax.f32 %v2391, 0.0
        %v2504 = vmax.f32 %v2396, 0.0
        %v2505 = vmax.f32 %v2399, 0.0
        %v2506 = vmax.f32 %v2404, 0.0
        %v2507 = vmax.f32 %v2407, 0.0
        %v2508 = vmax.f32 %v2412, 0.0
        %v2509 = vmax.f32 %v2415, 0.0
        %v2510 = vmax.f32 %v2420, 0.0
        %v2511 = vmax.f32 %v2423, 0.0
        %v2512 = vmax.f32 %v2428, 0.0
        %v2513 = vmax.f32 %v2431, 0.0
        %v2514 = vmax.f32 %v2436, 0.0
        %v2515 = vmax.f32 %v2439, 0.0
        %v2516 = vmax.f32 %v2444, 0.0
        %v2517 = vmax.f32 %v2447, 0.0
        %v2518 = vmax.f32 %v2452, 0.0
        %v2519 = vmax.f32 %v2455, 0.0
        %v2520 = vmax.f32 %v2460, 0.0
        %v2521 = vmax.f32 %v2463, 0.0
        %v2522 = vmax.f32 %v2468, 0.0
        %v2523 = vmax.f32 %v2471, 0.0
        %v2524 = vmax.f32 %v2476, 0.0
        %v2525 = vmax.f32 %v2479, 0.0
        %v2526 = vmax.f32 %v2484, 0.0
        %v2527 = vmax.f32 %v2487, 0.0
        %v2528 = vmax.f32 %v2492, 0.0
        %v2529 = vmax.f32 %v2495, 0.0
        %v2530 = vld [vmem:[%s6] sm:$0x3]
        %v2531 = vpack.c.bf16 %v2499, %v2498
        %v2532 = vpack.c.bf16 %v2501, %v2500
        %v2533 = vpack.c.bf16 %v2503, %v2502
        %v2534 = vpack.c.bf16 %v2505, %v2504
        %v2535 = vpack.c.bf16 %v2507, %v2506
        %v2536 = vpack.c.bf16 %v2509, %v2508
        %v2537 = vpack.c.bf16 %v2511, %v2510
        %v2538 = vpack.c.bf16 %v2513, %v2512
        %v2539 = vpack.c.bf16 %v2515, %v2514
        %v2540 = vpack.c.bf16 %v2517, %v2516
        %v2541 = vpack.c.bf16 %v2519, %v2518
        %v2542 = vpack.c.bf16 %v2521, %v2520
        %v2543 = vpack.c.bf16 %v2523, %v2522
        %v2544 = vpack.c.bf16 %v2525, %v2524
        %v2545 = vpack.c.bf16 %v2527, %v2526
        %v2546 = vpack.c.bf16 %v2529, %v2528
        %v2547 = vld [vmem:[%s7] sm:$0x3]
        %2549 = vset.pattern.permute.xlu0 0
        %2550 = vperm.xlu0 %2549, %v2547
        %v2551 = vpop.permute.xlu0 %2550
        %v2555 = vunpack.c.l.s4 1966171168
        %v2556 = vunpack.c.0.s8 %v2555
        %v2557 = vlaneseq
        %v2558 = vshrl.u32 %v2557, 7
        %v2559 = vsub.s32 %v2556, %v2558
        %v2560 = vrot.slane %v2530, %v2559
        %v2561 = vcombine.high %v2560, %v2560
        %v2563 = vunpack.c.l.s4 1966171168
        %v2564 = vunpack.c.0.s8 %v2563
        %v2565 = vlaneseq
        %v2566 = vshrl.u32 %v2565, 7
        %v2567 = vsub.s32 %v2564, %v2566
        %v2568 = vrot.slane %v2560, %v2567
        %v2570 = vunpack.c.l.s4 1966171168
        %v2571 = vunpack.c.0.s8 %v2570
        %v2572 = vlaneseq
        %v2573 = vshrl.u32 %v2572, 7
        %v2574 = vsub.s32 %v2571, %v2573
        %v2575 = vrot.slane %v2561, %v2574
        %2578 = vmatprep.subr.bf16.mxu0 0
        %2579 = vmatpush1.bf16.msra.mxu0 %v2531
        %2580 = vmatprep.subr.bf16.mxu0 0
        %2581 = vmatpush1.bf16.msra.mxu0 %v2532
        %2582 = vmatprep.subr.bf16.mxu0 0
        %2583 = vmatpush1.bf16.msra.mxu0 %v2533
        %2584 = vmatprep.subr.bf16.mxu0 0
        %2585 = vmatpush1.bf16.msra.mxu0 %v2534
        %2586 = vmatprep.subr.bf16.mxu0 0
        %2587 = vmatpush1.bf16.msra.mxu0 %v2535
        %2588 = vmatprep.subr.bf16.mxu0 0
        %2589 = vmatpush1.bf16.msra.mxu0 %v2536
        %2590 = vmatprep.subr.bf16.mxu0 0
        %2591 = vmatpush1.bf16.msra.mxu0 %v2537
        %2592 = vmatprep.subr.bf16.mxu0 0
        %2593 = vmatpush1.bf16.msra.mxu0 %v2538
        %2594 = vmatprep.subr.bf16.mxu0 0
        %2595 = vmatpush1.bf16.msra.mxu0 %v2539
        %2596 = vmatprep.subr.bf16.mxu0 0
        %2597 = vmatpush1.bf16.msra.mxu0 %v2540
        %2598 = vmatprep.subr.bf16.mxu0 0
        %2599 = vmatpush1.bf16.msra.mxu0 %v2541
        %2600 = vmatprep.subr.bf16.mxu0 0
        %2601 = vmatpush1.bf16.msra.mxu0 %v2542
        %2602 = vmatprep.subr.bf16.mxu0 0
        %2603 = vmatpush1.bf16.msra.mxu0 %v2543
        %2604 = vmatprep.subr.bf16.mxu0 0
        %2605 = vmatpush1.bf16.msra.mxu0 %v2544
        %2606 = vmatprep.subr.bf16.mxu0 0
        %2607 = vmatpush1.bf16.msra.mxu0 %v2545
        %2608 = vmatprep.subr.bf16.mxu0 0
        %2609 = vmatpush1.bf16.msra.mxu0 %v2546
        %2610 = vmatprep.mubr.bf16.mxu0 %v2575
        %2611 = vmatmul.mubr.bf16.gmra.mrb[0].mxu0 %v2568
        %v2612 = vpop.f32.mrb[0].mxu0
        %v2613 = vadd.f32 %v2551, %v2612
        %v2614 = vpop.f32.mrb[0].mxu0
        %v2615 = vpop.f32.mrb[0].mxu0
        %v2616 = vpop.f32.mrb[0].mxu0
        %2617 = vdwg.mxu0
        %v2618 = vtanh.pop %v2613
        %v2619 = vlaneseq
        %v2620 = vshrl.u32 %v2619, 7
        %vm2621 = vcmp.eq.s32.totalorder %v2620, 0
        %v2622 = vmul.f32 %v2618, 0.5
        %v2623 = vadd.f32 %v2622, 0.5
        %v2624 = vsel %vm2621, %v2623, %v2618
        %2625 = vst [vmem:[%s359] sm:$0x3] %v2624
        %s2626 = sand.u32 %s204, 1
        %s2627 = scalar_lea.sflag [#allocation5], %s2626
        %s2628 = sand.u32 %s204, 1
        %s2629 = smul.addr %s2628, 2
        %s2630 = scalar_lea.vmem [#allocation7], %s2629
        // Predicated region
        $region95: #{tpu_custom_call.1} parent=85 // pred_check
          %p2631 = pneg %p214
        $region96: #{tpu_custom_call.1} parent=85 // pred_check_branch
          %2633 = sbr.rel (%p2631) target = $region98
        $region97: #{tpu_custom_call.1} parent=85 // pred_region
          %s2635 = ssub.s32 32, 32
          %2636 = vsyncadd %s2627, %s2635
          %s2637 = smul.addr %s23, 32
          %s2638 = scalar_lea.hbm %s8, %s2637
          %s2640 = sshll.u32 %s2630, 4
          %s2641 = int_to_ptr.vmem [resolvable:$true] %s2640
          %2643 = dma.vmem_to_hbm [thread:$0]  %s2641, 32, %s2638, %s2627
        $region98: #{tpu_custom_call.1} parent=85 // pred_fallthru
          _
      $region86: #{tpu_custom_call.1} parent=5 // pred_fallthru
        _
      %p2644 = scmp.le.s32.totalorder 2, %s18
      // Predicated region
      $region99: #{tpu_custom_call.1} parent=5 // pred_check
        %p2645 = pneg %p2644
      $region100: #{tpu_custom_call.1} parent=5 // pred_check_branch
        %2647 = sbr.rel (%p2645) target = $region102
      $region101: #{tpu_custom_call.1} parent=5 // pred_region
        %s2648 = ssub.s32 %s18, 2
        // Predicated region
        $region103: #{tpu_custom_call.1} parent=101 // pred_check
          %p2649 = pneg %p220
        $region104: #{tpu_custom_call.1} parent=101 // pred_check_branch
          %2651 = sbr.rel (%p2649) target = $region106
        $region105: #{tpu_custom_call.1} parent=101 // pred_region
          %s2652 = sand.u32 %s205, 1
          %s2653 = scalar_lea.sflag [#allocation5], %s2652
          %s2654 = sand.u32 %s205, 1
          %s2655 = smul.addr %s2654, 2
          %s2656 = scalar_lea.vmem [#allocation7], %s2655
          %2657 = dma.done %s2653, 32
        $region106: #{tpu_custom_call.1} parent=101 // pred_fallthru
          _
      $region102: #{tpu_custom_call.1} parent=5 // pred_fallthru
        _
    $region6: #{tpu_custom_call.1} parent=1 // loop_footer
      %s22 = sadd.s32 1, %s18
    $region7: #{tpu_custom_call.1} parent=1 // loop_footer_branch
      %17 = sbr.rel target = $region3
    $region8: #{tpu_custom_call.1} parent=1 // loop_exit
      _
    %2658 = vsyncpa [#allocation5], 1
    %s2659 = scalar_lea.sflag [#allocation5], 1
    %2660 = vsyncpa %s2659, 1
    %2661 = vsyncpa [#allocation6], 1
    %s2662 = scalar_lea.sflag [#allocation6], 1
    %2663 = vsyncpa %s2662, 1

</llo_original>
